<compile_context>
chip_gen: v5e
topology: v5e:2x2
jax: 0.10.0
libtpu: 0.0.40
codegen_flags: <defaults>
</compile_context>

<pallas_src>
import functools

import jax
import jax.numpy as jnp
from jax import lax
from jax.experimental import pallas as pl
from jax.experimental.pallas import tpu as pltpu


def _round_up(x, m):
    return (x + m - 1) // m * m


def fold_bn(gamma, beta, mean, var, eps=1e-5):
    scale = gamma / jnp.sqrt(var + eps)
    bias = beta - mean * scale
    return scale, bias


# --------------------------------------------------------------------------- #
# Fused Bottleneck kernel: one grid step == one image (NHWC, flattened rows).
# --------------------------------------------------------------------------- #
def _bottleneck_kernel(x_ref, w1_ref, w2_ref, w3_ref, b1_ref, b2_ref, b3_ref,
                       o_ref, p1_ref, acc_ref, c_ref, *, H, W, Wp, off0):
    HW = H * W
    HWp = H * Wp
    prows, wpad = p1_ref.shape
    f32 = jnp.float32

    # -- stage 1: 1x1 conv (BN scale folded into w1) + bias + relu ----------- #
    a1 = jnp.dot(x_ref[0].astype(jnp.bfloat16), w1_ref[...],
                 preferred_element_type=f32)
    out1 = jnp.maximum(a1 + b1_ref[...], 0.0)                # (HW, wpad) f32

    # -- scatter out1 straight into the flat, zero-padded row buffer --------- #
    #   p1[off0 + h*Wp + w] = out1[h, w]
    # Only the pad regions (head, tail, per-row gaps) are re-zeroed each step;
    # data rows are fully overwritten each step, so no program_id-gated init.
    p1_ref[pl.ds(0, off0), :] = jnp.zeros((off0, wpad), f32)
    p1_ref[pl.ds(off0 + HWp, prows - off0 - HWp), :] = jnp.zeros(
        (prows - off0 - HWp, wpad), f32)
    zgap = jnp.zeros((Wp - W, wpad), f32)
    for h in range(H):                       # all starts static & 8-aligned
        base = off0 + h * Wp
        p1_ref[pl.ds(base, W), :] = out1[h * W:(h + 1) * W, :]
        p1_ref[pl.ds(base + W, Wp - W), :] = zgap

    # -- stage 2: 3x3 conv (pad=1, stride=1) as 3 K-folded MXU matmuls ------- #
    # For each dh, the dw = -1/0/+1 shifted windows are concatenated along the
    # channel (lane) axis -> one (HWp, 3*wpad) bf16 operand, one K=3*wpad
    # matmul against w2_ref[dh] (3*wpad, wpad), accumulated in acc_ref (f32).
    # Columns c >= W of each row-block are don't-care and dropped at compaction.
    for dh in range(3):
        s = off0 + (dh - 1) * Wp
        a_cat = jnp.concatenate(
            [p1_ref[pl.ds(s - 1, HWp), :],
             p1_ref[pl.ds(s, HWp), :],
             p1_ref[pl.ds(s + 1, HWp), :]], axis=1).astype(jnp.bfloat16)
        t = jnp.dot(a_cat, w2_ref[dh], preferred_element_type=f32)
        if dh == 0:
            acc_ref[...] = t
        else:
            acc_ref[...] += t

    # -- compact out2 (drop pad columns), fusing bias + relu into the copy --- #
    b2v = b2_ref[...]
    for h in range(H):
        c_ref[pl.ds(h * W, W), :] = jnp.maximum(
            acc_ref[pl.ds(h * Wp, W), :] + b2v, 0.0)

    # -- stage 3: 1x1 conv + bias + residual add + relu ---------------------- #
    a3 = jnp.dot(c_ref[...].astype(jnp.bfloat16), w3_ref[...],
                 preferred_element_type=f32)
    o_ref[0] = jnp.maximum(a3 + b3_ref[...] + x_ref[0], 0.0).astype(o_ref.dtype)


# --------------------------------------------------------------------------- #
# Wrapper: layout plumbing, BN folding, channel padding, pallas_call.
# --------------------------------------------------------------------------- #
def bottleneck_forward(x_nchw, params, stride=1, out_dtype=jnp.bfloat16):
    """Fused Bottleneck forward. Eval-mode BN, stride=1, downsample=None."""
    if stride != 1:
        raise NotImplementedError("stride != 1 requires a downsample branch")

    N, Cin, H, W = x_nchw.shape
    w1, w2, w3 = params["w1"], params["w2"], params["w3"]
    width = w1.shape[0]
    cout = w3.shape[0]
    if Cin != cout:
        raise NotImplementedError(
            "identity residual requires in_channel == 4 * out_channel")

    s1, b1 = fold_bn(*params["bn1"])
    s2, b2 = fold_bn(*params["bn2"])
    s3, b3 = fold_bn(*params["bn3"])

    wpad = _round_up(width, 128)
    cpad = _round_up(cout, 128)

    # Fold BN scale into the conv weights, pad channels to 128 lanes, cast bf16.
    w1m = jnp.transpose(w1[:, :, 0, 0], (1, 0)) * s1[None, :]          # (Cin, width)
    w2m = jnp.transpose(w2, (2, 3, 1, 0)) * s2[None, None, None, :]    # (kh, kw, I, O)
    w3m = jnp.transpose(w3[:, :, 0, 0], (1, 0)) * s3[None, :]          # (width, cout)

    w1p = jnp.pad(w1m, ((0, cpad - Cin), (0, wpad - width))).astype(jnp.bfloat16)
    w2p = jnp.pad(w2m, ((0, 0), (0, 0), (0, wpad - width), (0, wpad - width)))
    w2p = w2p.reshape(3, 3 * wpad, wpad).astype(jnp.bfloat16)          # K-folded
    w3p = jnp.pad(w3m, ((0, wpad - width), (0, cpad - cout))).astype(jnp.bfloat16)
    b1p = jnp.pad(b1, (0, wpad - width)).reshape(1, wpad).astype(jnp.float32)
    b2p = jnp.pad(b2, (0, wpad - width)).reshape(1, wpad).astype(jnp.float32)
    b3p = jnp.pad(b3, (0, cpad - cout)).reshape(1, cpad).astype(jnp.float32)

    # NCHW -> NHWC -> (N, H*W, C).  Identity stays f32 (exact residual add).
    # TODO(synk): keep the surrounding network NHWC to avoid these transposes.
    x3 = jnp.transpose(x_nchw, (0, 2, 3, 1)).reshape(N, H * W, Cin)
    if cpad != Cin:
        x3 = jnp.pad(x3, ((0, 0), (0, 0), (0, cpad - Cin)))

    HW = H * W
    Wp = _round_up(W + 2, 8)          # column-padded row pitch (8-aligned)
    off0 = Wp + 8                     # first interior row (keeps stores 8-aligned)
    HWp = H * Wp
    prows = (H + 2) * Wp + 16         # top/bottom zero pad + read guard rows

    # VMEM footprint estimate (double-buffered IO blocks + scratch + weights +
    # in-kernel temporaries) -> per-generation-safe limit (<= 40 MiB for v7x).
    out_isz = jnp.dtype(out_dtype).itemsize
    vmem_need = (
        2 * HW * cpad * 4 + 2 * HW * cpad * out_isz
        + (prows + HWp + HW) * wpad * 4
        + (cpad * wpad + 9 * wpad * wpad + wpad * cpad) * 2
        + (2 * wpad + cpad) * 4
        + HWp * 3 * wpad * 2                 # K-folded stage-2 operand (bf16)
        + 2 * HW * max(wpad, cpad) * 4)      # out1 / a3 temporaries
    vmem_limit = int(min(max(vmem_need * 3 // 2, 16 * 2**20), 40 * 2**20))

    weight_bytes = ((cpad * wpad + 9 * wpad * wpad + wpad * cpad) * 2
                    + (2 * wpad + cpad) * 4)
    cost = pl.CostEstimate(
        flops=int(2 * N * (HW * cpad * wpad
                           + 9 * HWp * wpad * wpad
                           + HW * wpad * cpad)),
        transcendentals=0,
        bytes_accessed=int(N * HW * cpad * (4 + out_isz) + weight_bytes),
    )

    kernel = functools.partial(_bottleneck_kernel, H=H, W=W, Wp=Wp, off0=off0)

    out3d = pl.pallas_call(
        kernel,
        out_shape=jax.ShapeDtypeStruct((N, HW, cpad), out_dtype),
        grid_spec=pltpu.PrefetchScalarGridSpec(
            num_scalar_prefetch=0,
            grid=(N,),
            in_specs=[
                pl.BlockSpec((1, HW, cpad), lambda n: (n, 0, 0)),     # x / identity
                pl.BlockSpec((cpad, wpad), lambda n: (0, 0)),         # w1 (resident)
                pl.BlockSpec((3, 3 * wpad, wpad), lambda n: (0, 0, 0)),  # w2 K-folded
                pl.BlockSpec((wpad, cpad), lambda n: (0, 0)),         # w3
                pl.BlockSpec((1, wpad), lambda n: (0, 0)),            # b1
                pl.BlockSpec((1, wpad), lambda n: (0, 0)),            # b2
                pl.BlockSpec((1, cpad), lambda n: (0, 0)),            # b3
            ],
            out_specs=pl.BlockSpec((1, HW, cpad), lambda n: (n, 0, 0)),
            scratch_shapes=[
                pltpu.VMEM((prows, wpad), jnp.float32),  # zero-padded out1 rows
                pltpu.VMEM((HWp, wpad), jnp.float32),    # stage-2 accumulator
                pltpu.VMEM((HW, wpad), jnp.float32),     # compact out2
            ],
        ),
        compiler_params=pltpu.CompilerParams(
            dimension_semantics=("parallel",),
            vmem_limit_bytes=vmem_limit,
        ),
        cost_estimate=cost,
    )(x3, w1p, w2p, w3p, b1p, b2p, b3p)

    out = out3d[:, :, :cout].reshape(N, H, W, cout)
    return jnp.transpose(out, (0, 3, 1, 2))                  # back to NCHW


# --------------------------------------------------------------------------- #
# Pure-JAX reference (lax.conv) for verification.
# --------------------------------------------------------------------------- #
def bottleneck_reference(x, params, stride=1):
    def conv(x, w, stride, pad):
        return lax.conv_general_dilated(
            x, w, window_strides=(stride, stride),
            padding=[(pad, pad), (pad, pad)],
            dimension_numbers=("NCHW", "OIHW", "NCHW"))

    def bn(x, p):
        s, b = fold_bn(*p)
        return x * s[None, :, None, None] + b[None, :, None, None]

    identity = x
    out = jax.nn.relu(bn(conv(x, params["w1"], 1, 0), params["bn1"]))
    out = jax.nn.relu(bn(conv(out, params["w2"], stride, 1), params["bn2"]))
    out = bn(conv(out, params["w3"], 1, 0), params["bn3"])
    return jax.nn.relu(out + identity)


# --------------------------------------------------------------------------- #
def make_params(key, in_channel, out_channel, groups=1, width_per_group=64):
    expansion = 4
    width = int(out_channel * (width_per_group / 64.0)) * groups
    cout = out_channel * expansion
    k1, k2, k3 = jax.random.split(key, 3)

    def bn_params(c, seed):
        t = jnp.arange(c, dtype=jnp.float32)
        gamma = 1.0 + 0.1 * jnp.sin(t + seed)
        beta = 0.05 * jnp.cos(t + seed)
        mean = 0.02 * jnp.sin(0.5 * t + seed)
        var = 1.0 + 0.1 * jnp.cos(0.3 * t + seed)
        return (gamma, beta, mean, var)

    return {
        "w1": 0.1 * jax.random.normal(k1, (width, in_channel, 1, 1), jnp.float32),
        "w2": 0.1 * jax.random.normal(k2, (width, width, 3, 3), jnp.float32),
        "w3": 0.1 * jax.random.normal(k3, (cout, width, 1, 1), jnp.float32),
        "bn1": bn_params(width, 1),
        "bn2": bn_params(width, 2),
        "bn3": bn_params(cout, 3),
    }


if __name__ == "__main__":
    # Small shapes: out_channel=32 -> width=32 (padded to 128 internally) and
    # output channels = 128 (lane-dense).  in_channel = 128 so the identity
    # residual works with downsample=None, stride=1.
    N, out_channel, H, W = 2, 32, 8, 8
    in_channel = out_channel * 4  # 128
    stride = 1

    key = jax.random.PRNGKey(0)
    kx, kp = jax.random.split(key)
    x = jax.random.normal(kx, (N, in_channel, H, W), jnp.float32)
    params = make_params(kp, in_channel, out_channel)

    fwd = jax.jit(bottleneck_forward)
    out = jax.block_until_ready(fwd(x, params))

    # Reference with the same bf16-rounded weights the kernel feeds the MXU
    # (isolates kernel correctness from weight quantization error).
    params_q = dict(params)
    for name in ("w1", "w2", "w3"):
        params_q[name] = params[name].astype(jnp.bfloat16).astype(jnp.float32)
    ref = jax.block_until_ready(bottleneck_reference(x, params_q, stride=stride))

    assert out.shape == (N, out_channel * 4, H, W), out.shape
    out_f32 = out.astype(jnp.float32)
    max_err = float(jnp.max(jnp.abs(out_f32 - ref)))
    assert jnp.allclose(out_f32, ref, rtol=2.5e-2, atol=2.5e-2), max_err

    print("KERNEL_OK")
</pallas_src>

<mosaic_0001>
module attributes {stable_mosaic.version = 11 : i64} {
  func.func @_bottleneck_kernel(%arg0: i32, %arg1: memref<1x64x128xf32, #tpu.memory_space<vmem>>, %arg2: memref<128x128xbf16, #tpu.memory_space<vmem>>, %arg3: memref<3x384x128xbf16, #tpu.memory_space<vmem>>, %arg4: memref<128x128xbf16, #tpu.memory_space<vmem>>, %arg5: memref<1x128xf32, #tpu.memory_space<vmem>>, %arg6: memref<1x128xf32, #tpu.memory_space<vmem>>, %arg7: memref<1x128xf32, #tpu.memory_space<vmem>>, %arg8: memref<1x64x128xbf16, #tpu.memory_space<vmem>>, %arg9: memref<176x128xf32, #tpu.memory_space<vmem>>, %arg10: memref<128x128xf32, #tpu.memory_space<vmem>>, %arg11: memref<64x128xf32, #tpu.memory_space<vmem>>) attributes {dimension_semantics = [#tpu.dimension_semantics<parallel>], iteration_bounds = array<i64: 2>, scalar_prefetch = 0 : i64, scratch_operands = 3 : i64, tpu.core_type = #tpu.core_type<tc>, window_params = [{transform_indices = @transform_0, window_bounds = array<i64: 1, 64, 128>}, {pipeline_mode = #tpu.pipeline_mode<synchronous>, transform_indices = @transform_1, window_bounds = array<i64: 128, 128>}, {pipeline_mode = #tpu.pipeline_mode<synchronous>, transform_indices = @transform_2, window_bounds = array<i64: 3, 384, 128>}, {pipeline_mode = #tpu.pipeline_mode<synchronous>, transform_indices = @transform_3, window_bounds = array<i64: 128, 128>}, {pipeline_mode = #tpu.pipeline_mode<synchronous>, transform_indices = @transform_4, window_bounds = array<i64: 1, 128>}, {pipeline_mode = #tpu.pipeline_mode<synchronous>, transform_indices = @transform_5, window_bounds = array<i64: 1, 128>}, {pipeline_mode = #tpu.pipeline_mode<synchronous>, transform_indices = @transform_6, window_bounds = array<i64: 1, 128>}, {transform_indices = @transform_7, window_bounds = array<i64: 1, 64, 128>}]} {
    %c0 = arith.constant 0 : index
    %c0_0 = arith.constant 0 : index
    %c0_1 = arith.constant 0 : index
    %0 = vector.load %arg1[%c0, %c0_0, %c0_1] : memref<1x64x128xf32, #tpu.memory_space<vmem>>, vector<1x64x128xf32>
    %1 = vector.shape_cast %0 : vector<1x64x128xf32> to vector<64x128xf32>
    %2 = arith.truncf %1 : vector<64x128xf32> to vector<64x128xbf16>
    %c0_2 = arith.constant 0 : index
    %c0_3 = arith.constant 0 : index
    %3 = vector.load %arg2[%c0_2, %c0_3] : memref<128x128xbf16, #tpu.memory_space<vmem>>, vector<128x128xbf16>
    %cst = arith.constant dense<0.000000e+00> : vector<64x128xf32>
    %4 = tpu.matmul %2, %3, %cst {dimension_numbers = #tpu.dot_dimension_numbers<[1], [0], [0], [1], [0, 0, 1, 1], [], []>} : vector<64x128xbf16>, vector<128x128xbf16>, vector<64x128xf32> -> vector<64x128xf32>
    %c0_4 = arith.constant 0 : index
    %c0_5 = arith.constant 0 : index
    %5 = vector.load %arg5[%c0_4, %c0_5] : memref<1x128xf32, #tpu.memory_space<vmem>>, vector<1x128xf32>
    %6 = vector.broadcast %5 : vector<1x128xf32> to vector<64x128xf32>
    %7 = arith.addf %4, %6 : vector<64x128xf32>
    %cst_6 = arith.constant 0.000000e+00 : f32
    %8 = vector.broadcast %cst_6 : f32 to vector<64x128xf32>
    %9 = arith.maximumf %7, %8 : vector<64x128xf32>
    %cst_7 = arith.constant 0.000000e+00 : f32
    %10 = vector.broadcast %cst_7 : f32 to vector<24x128xf32>
    %c0_8 = arith.constant 0 : index
    %c0_9 = arith.constant 0 : index
    %11 = vector.load %arg9[%c0_8, %c0_9] : memref<176x128xf32, #tpu.memory_space<vmem>>, vector<24x128xf32>
    tpu.vector_store %arg9[%c0_8, %c0_9], %10 {strides = array<i32>} : memref<176x128xf32, #tpu.memory_space<vmem>>, vector<24x128xf32>,
    %cst_10 = arith.constant 0.000000e+00 : f32
    %12 = vector.broadcast %cst_10 : f32 to vector<24x128xf32>
    %c152 = arith.constant 152 : index
    %c0_11 = arith.constant 0 : index
    %13 = vector.load %arg9[%c152, %c0_11] : memref<176x128xf32, #tpu.memory_space<vmem>>, vector<24x128xf32>
    tpu.vector_store %arg9[%c152, %c0_11], %12 {strides = array<i32>} : memref<176x128xf32, #tpu.memory_space<vmem>>, vector<24x128xf32>,
    %cst_12 = arith.constant 0.000000e+00 : f32
    %14 = vector.broadcast %cst_12 : f32 to vector<8x128xf32>
    %15 = vector.extract_strided_slice %9 {offsets = [0, 0], sizes = [8, 128], strides = [1, 1]} : vector<64x128xf32> to vector<8x128xf32>
    %c24 = arith.constant 24 : index
    %c0_13 = arith.constant 0 : index
    %16 = vector.load %arg9[%c24, %c0_13] : memref<176x128xf32, #tpu.memory_space<vmem>>, vector<8x128xf32>
    tpu.vector_store %arg9[%c24, %c0_13], %15 {strides = array<i32>} : memref<176x128xf32, #tpu.memory_space<vmem>>, vector<8x128xf32>,
    %c32 = arith.constant 32 : index
    %c0_14 = arith.constant 0 : index
    %17 = vector.load %arg9[%c32, %c0_14] : memref<176x128xf32, #tpu.memory_space<vmem>>, vector<8x128xf32>
    tpu.vector_store %arg9[%c32, %c0_14], %14 {strides = array<i32>} : memref<176x128xf32, #tpu.memory_space<vmem>>, vector<8x128xf32>,
    %18 = vector.extract_strided_slice %9 {offsets = [8, 0], sizes = [8, 128], strides = [1, 1]} : vector<64x128xf32> to vector<8x128xf32>
    %c40 = arith.constant 40 : index
    %c0_15 = arith.constant 0 : index
    %19 = vector.load %arg9[%c40, %c0_15] : memref<176x128xf32, #tpu.memory_space<vmem>>, vector<8x128xf32>
    tpu.vector_store %arg9[%c40, %c0_15], %18 {strides = array<i32>} : memref<176x128xf32, #tpu.memory_space<vmem>>, vector<8x128xf32>,
    %c48 = arith.constant 48 : index
    %c0_16 = arith.constant 0 : index
    %20 = vector.load %arg9[%c48, %c0_16] : memref<176x128xf32, #tpu.memory_space<vmem>>, vector<8x128xf32>
    tpu.vector_store %arg9[%c48, %c0_16], %14 {strides = array<i32>} : memref<176x128xf32, #tpu.memory_space<vmem>>, vector<8x128xf32>,
    %21 = vector.extract_strided_slice %9 {offsets = [16, 0], sizes = [8, 128], strides = [1, 1]} : vector<64x128xf32> to vector<8x128xf32>
    %c56 = arith.constant 56 : index
    %c0_17 = arith.constant 0 : index
    %22 = vector.load %arg9[%c56, %c0_17] : memref<176x128xf32, #tpu.memory_space<vmem>>, vector<8x128xf32>
    tpu.vector_store %arg9[%c56, %c0_17], %21 {strides = array<i32>} : memref<176x128xf32, #tpu.memory_space<vmem>>, vector<8x128xf32>,
    %c64 = arith.constant 64 : index
    %c0_18 = arith.constant 0 : index
    %23 = vector.load %arg9[%c64, %c0_18] : memref<176x128xf32, #tpu.memory_space<vmem>>, vector<8x128xf32>
    tpu.vector_store %arg9[%c64, %c0_18], %14 {strides = array<i32>} : memref<176x128xf32, #tpu.memory_space<vmem>>, vector<8x128xf32>,
    %24 = vector.extract_strided_slice %9 {offsets = [24, 0], sizes = [8, 128], strides = [1, 1]} : vector<64x128xf32> to vector<8x128xf32>
    %c72 = arith.constant 72 : index
    %c0_19 = arith.constant 0 : index
    %25 = vector.load %arg9[%c72, %c0_19] : memref<176x128xf32, #tpu.memory_space<vmem>>, vector<8x128xf32>
    tpu.vector_store %arg9[%c72, %c0_19], %24 {strides = array<i32>} : memref<176x128xf32, #tpu.memory_space<vmem>>, vector<8x128xf32>,
    %c80 = arith.constant 80 : index
    %c0_20 = arith.constant 0 : index
    %26 = vector.load %arg9[%c80, %c0_20] : memref<176x128xf32, #tpu.memory_space<vmem>>, vector<8x128xf32>
    tpu.vector_store %arg9[%c80, %c0_20], %14 {strides = array<i32>} : memref<176x128xf32, #tpu.memory_space<vmem>>, vector<8x128xf32>,
    %27 = vector.extract_strided_slice %9 {offsets = [32, 0], sizes = [8, 128], strides = [1, 1]} : vector<64x128xf32> to vector<8x128xf32>
    %c88 = arith.constant 88 : index
    %c0_21 = arith.constant 0 : index
    %28 = vector.load %arg9[%c88, %c0_21] : memref<176x128xf32, #tpu.memory_space<vmem>>, vector<8x128xf32>
    tpu.vector_store %arg9[%c88, %c0_21], %27 {strides = array<i32>} : memref<176x128xf32, #tpu.memory_space<vmem>>, vector<8x128xf32>,
    %c96 = arith.constant 96 : index
    %c0_22 = arith.constant 0 : index
    %29 = vector.load %arg9[%c96, %c0_22] : memref<176x128xf32, #tpu.memory_space<vmem>>, vector<8x128xf32>
    tpu.vector_store %arg9[%c96, %c0_22], %14 {strides = array<i32>} : memref<176x128xf32, #tpu.memory_space<vmem>>, vector<8x128xf32>,
    %30 = vector.extract_strided_slice %9 {offsets = [40, 0], sizes = [8, 128], strides = [1, 1]} : vector<64x128xf32> to vector<8x128xf32>
    %c104 = arith.constant 104 : index
    %c0_23 = arith.constant 0 : index
    %31 = vector.load %arg9[%c104, %c0_23] : memref<176x128xf32, #tpu.memory_space<vmem>>, vector<8x128xf32>
    tpu.vector_store %arg9[%c104, %c0_23], %30 {strides = array<i32>} : memref<176x128xf32, #tpu.memory_space<vmem>>, vector<8x128xf32>,
    %c112 = arith.constant 112 : index
    %c0_24 = arith.constant 0 : index
    %32 = vector.load %arg9[%c112, %c0_24] : memref<176x128xf32, #tpu.memory_space<vmem>>, vector<8x128xf32>
    tpu.vector_store %arg9[%c112, %c0_24], %14 {strides = array<i32>} : memref<176x128xf32, #tpu.memory_space<vmem>>, vector<8x128xf32>,
    %33 = vector.extract_strided_slice %9 {offsets = [48, 0], sizes = [8, 128], strides = [1, 1]} : vector<64x128xf32> to vector<8x128xf32>
    %c120 = arith.constant 120 : index
    %c0_25 = arith.constant 0 : index
    %34 = vector.load %arg9[%c120, %c0_25] : memref<176x128xf32, #tpu.memory_space<vmem>>, vector<8x128xf32>
    tpu.vector_store %arg9[%c120, %c0_25], %33 {strides = array<i32>} : memref<176x128xf32, #tpu.memory_space<vmem>>, vector<8x128xf32>,
    %c128 = arith.constant 128 : index
    %c0_26 = arith.constant 0 : index
    %35 = vector.load %arg9[%c128, %c0_26] : memref<176x128xf32, #tpu.memory_space<vmem>>, vector<8x128xf32>
    tpu.vector_store %arg9[%c128, %c0_26], %14 {strides = array<i32>} : memref<176x128xf32, #tpu.memory_space<vmem>>, vector<8x128xf32>,
    %36 = vector.extract_strided_slice %9 {offsets = [56, 0], sizes = [8, 128], strides = [1, 1]} : vector<64x128xf32> to vector<8x128xf32>
    %c136 = arith.constant 136 : index
    %c0_27 = arith.constant 0 : index
    %37 = vector.load %arg9[%c136, %c0_27] : memref<176x128xf32, #tpu.memory_space<vmem>>, vector<8x128xf32>
    tpu.vector_store %arg9[%c136, %c0_27], %36 {strides = array<i32>} : memref<176x128xf32, #tpu.memory_space<vmem>>, vector<8x128xf32>,
    %c144 = arith.constant 144 : index
    %c0_28 = arith.constant 0 : index
    %38 = vector.load %arg9[%c144, %c0_28] : memref<176x128xf32, #tpu.memory_space<vmem>>, vector<8x128xf32>
    tpu.vector_store %arg9[%c144, %c0_28], %14 {strides = array<i32>} : memref<176x128xf32, #tpu.memory_space<vmem>>, vector<8x128xf32>,
    %c7 = arith.constant 7 : index
    %c0_29 = arith.constant 0 : index
    %39 = vector.load %arg9[%c7, %c0_29] : memref<176x128xf32, #tpu.memory_space<vmem>>, vector<128x128xf32>
    %c8 = arith.constant 8 : index
    %c0_30 = arith.constant 0 : index
    %40 = vector.load %arg9[%c8, %c0_30] : memref<176x128xf32, #tpu.memory_space<vmem>>, vector<128x128xf32>
    %c9 = arith.constant 9 : index
    %c0_31 = arith.constant 0 : index
    %41 = vector.load %arg9[%c9, %c0_31] : memref<176x128xf32, #tpu.memory_space<vmem>>, vector<128x128xf32>
    %42 = tpu.concatenate %39, %40, %41 in 1 : vector<128x128xf32>, vector<128x128xf32>, vector<128x128xf32> -> vector<128x384xf32>
    %43 = arith.truncf %42 : vector<128x384xf32> to vector<128x384xbf16>
    %c0_32 = arith.constant 0 : index
    %c0_33 = arith.constant 0 : index
    %c0_34 = arith.constant 0 : index
    %44 = vector.load %arg3[%c0_32, %c0_33, %c0_34] : memref<3x384x128xbf16, #tpu.memory_space<vmem>>, vector<1x384x128xbf16>
    %45 = vector.shape_cast %44 : vector<1x384x128xbf16> to vector<384x128xbf16>
    %cst_35 = arith.constant dense<0.000000e+00> : vector<128x128xf32>
    %46 = tpu.matmul %43, %45, %cst_35 {dimension_numbers = #tpu.dot_dimension_numbers<[1], [0], [0], [1], [0, 0, 1, 1], [], []>} : vector<128x384xbf16>, vector<384x128xbf16>, vector<128x128xf32> -> vector<128x128xf32>
    %c0_36 = arith.constant 0 : index
    %c0_37 = arith.constant 0 : index
    %47 = vector.load %arg10[%c0_36, %c0_37] : memref<128x128xf32, #tpu.memory_space<vmem>>, vector<128x128xf32>
    tpu.vector_store %arg10[%c0_36, %c0_37], %46 {strides = array<i32>} : memref<128x128xf32, #tpu.memory_space<vmem>>, vector<128x128xf32>,
    %c23 = arith.constant 23 : index
    %c0_38 = arith.constant 0 : index
    %48 = vector.load %arg9[%c23, %c0_38] : memref<176x128xf32, #tpu.memory_space<vmem>>, vector<128x128xf32>
    %c24_39 = arith.constant 24 : index
    %c0_40 = arith.constant 0 : index
    %49 = vector.load %arg9[%c24_39, %c0_40] : memref<176x128xf32, #tpu.memory_space<vmem>>, vector<128x128xf32>
    %c25 = arith.constant 25 : index
    %c0_41 = arith.constant 0 : index
    %50 = vector.load %arg9[%c25, %c0_41] : memref<176x128xf32, #tpu.memory_space<vmem>>, vector<128x128xf32>
    %51 = tpu.concatenate %48, %49, %50 in 1 : vector<128x128xf32>, vector<128x128xf32>, vector<128x128xf32> -> vector<128x384xf32>
    %52 = arith.truncf %51 : vector<128x384xf32> to vector<128x384xbf16>
    %c1 = arith.constant 1 : index
    %c0_42 = arith.constant 0 : index
    %c0_43 = arith.constant 0 : index
    %53 = vector.load %arg3[%c1, %c0_42, %c0_43] : memref<3x384x128xbf16, #tpu.memory_space<vmem>>, vector<1x384x128xbf16>
    %54 = vector.shape_cast %53 : vector<1x384x128xbf16> to vector<384x128xbf16>
    %cst_44 = arith.constant dense<0.000000e+00> : vector<128x128xf32>
    %55 = tpu.matmul %52, %54, %cst_44 {dimension_numbers = #tpu.dot_dimension_numbers<[1], [0], [0], [1], [0, 0, 1, 1], [], []>} : vector<128x384xbf16>, vector<384x128xbf16>, vector<128x128xf32> -> vector<128x128xf32>
    %c0_45 = arith.constant 0 : index
    %c0_46 = arith.constant 0 : index
    %56 = vector.load %arg10[%c0_45, %c0_46] : memref<128x128xf32, #tpu.memory_space<vmem>>, vector<128x128xf32>
    %57 = arith.addf %56, %55 : vector<128x128xf32>
    %c0_47 = arith.constant 0 : index
    %c0_48 = arith.constant 0 : index
    %58 = vector.load %arg10[%c0_47, %c0_48] : memref<128x128xf32, #tpu.memory_space<vmem>>, vector<128x128xf32>
    tpu.vector_store %arg10[%c0_47, %c0_48], %57 {strides = array<i32>} : memref<128x128xf32, #tpu.memory_space<vmem>>, vector<128x128xf32>,
    %c39 = arith.constant 39 : index
    %c0_49 = arith.constant 0 : index
    %59 = vector.load %arg9[%c39, %c0_49] : memref<176x128xf32, #tpu.memory_space<vmem>>, vector<128x128xf32>
    %c40_50 = arith.constant 40 : index
    %c0_51 = arith.constant 0 : index
    %60 = vector.load %arg9[%c40_50, %c0_51] : memref<176x128xf32, #tpu.memory_space<vmem>>, vector<128x128xf32>
    %c41 = arith.constant 41 : index
    %c0_52 = arith.constant 0 : index
    %61 = vector.load %arg9[%c41, %c0_52] : memref<176x128xf32, #tpu.memory_space<vmem>>, vector<128x128xf32>
    %62 = tpu.concatenate %59, %60, %61 in 1 : vector<128x128xf32>, vector<128x128xf32>, vector<128x128xf32> -> vector<128x384xf32>
    %63 = arith.truncf %62 : vector<128x384xf32> to vector<128x384xbf16>
    %c2 = arith.constant 2 : index
    %c0_53 = arith.constant 0 : index
    %c0_54 = arith.constant 0 : index
    %64 = vector.load %arg3[%c2, %c0_53, %c0_54] : memref<3x384x128xbf16, #tpu.memory_space<vmem>>, vector<1x384x128xbf16>
    %65 = vector.shape_cast %64 : vector<1x384x128xbf16> to vector<384x128xbf16>
    %cst_55 = arith.constant dense<0.000000e+00> : vector<128x128xf32>
    %66 = tpu.matmul %63, %65, %cst_55 {dimension_numbers = #tpu.dot_dimension_numbers<[1], [0], [0], [1], [0, 0, 1, 1], [], []>} : vector<128x384xbf16>, vector<384x128xbf16>, vector<128x128xf32> -> vector<128x128xf32>
    %c0_56 = arith.constant 0 : index
    %c0_57 = arith.constant 0 : index
    %67 = vector.load %arg10[%c0_56, %c0_57] : memref<128x128xf32, #tpu.memory_space<vmem>>, vector<128x128xf32>
    %68 = arith.addf %67, %66 : vector<128x128xf32>
    %c0_58 = arith.constant 0 : index
    %c0_59 = arith.constant 0 : index
    %69 = vector.load %arg10[%c0_58, %c0_59] : memref<128x128xf32, #tpu.memory_space<vmem>>, vector<128x128xf32>
    tpu.vector_store %arg10[%c0_58, %c0_59], %68 {strides = array<i32>} : memref<128x128xf32, #tpu.memory_space<vmem>>, vector<128x128xf32>,
    %c0_60 = arith.constant 0 : index
    %c0_61 = arith.constant 0 : index
    %70 = vector.load %arg6[%c0_60, %c0_61] : memref<1x128xf32, #tpu.memory_space<vmem>>, vector<1x128xf32>
    %c0_62 = arith.constant 0 : index
    %c0_63 = arith.constant 0 : index
    %71 = vector.load %arg10[%c0_62, %c0_63] : memref<128x128xf32, #tpu.memory_space<vmem>>, vector<8x128xf32>
    %72 = vector.broadcast %70 : vector<1x128xf32> to vector<8x128xf32>
    %73 = arith.addf %71, %72 : vector<8x128xf32>
    %cst_64 = arith.constant 0.000000e+00 : f32
    %74 = vector.broadcast %cst_64 : f32 to vector<8x128xf32>
    %75 = arith.maximumf %73, %74 : vector<8x128xf32>
    %c0_65 = arith.constant 0 : index
    %c0_66 = arith.constant 0 : index
    %76 = vector.load %arg11[%c0_65, %c0_66] : memref<64x128xf32, #tpu.memory_space<vmem>>, vector<8x128xf32>
    tpu.vector_store %arg11[%c0_65, %c0_66], %75 {strides = array<i32>} : memref<64x128xf32, #tpu.memory_space<vmem>>, vector<8x128xf32>,
    %c16 = arith.constant 16 : index
    %c0_67 = arith.constant 0 : index
    %77 = vector.load %arg10[%c16, %c0_67] : memref<128x128xf32, #tpu.memory_space<vmem>>, vector<8x128xf32>
    %78 = vector.broadcast %70 : vector<1x128xf32> to vector<8x128xf32>
    %79 = arith.addf %77, %78 : vector<8x128xf32>
    %cst_68 = arith.constant 0.000000e+00 : f32
    %80 = vector.broadcast %cst_68 : f32 to vector<8x128xf32>
    %81 = arith.maximumf %79, %80 : vector<8x128xf32>
    %c8_69 = arith.constant 8 : index
    %c0_70 = arith.constant 0 : index
    %82 = vector.load %arg11[%c8_69, %c0_70] : memref<64x128xf32, #tpu.memory_space<vmem>>, vector<8x128xf32>
    tpu.vector_store %arg11[%c8_69, %c0_70], %81 {strides = array<i32>} : memref<64x128xf32, #tpu.memory_space<vmem>>, vector<8x128xf32>,
    %c32_71 = arith.constant 32 : index
    %c0_72 = arith.constant 0 : index
    %83 = vector.load %arg10[%c32_71, %c0_72] : memref<128x128xf32, #tpu.memory_space<vmem>>, vector<8x128xf32>
    %84 = vector.broadcast %70 : vector<1x128xf32> to vector<8x128xf32>
    %85 = arith.addf %83, %84 : vector<8x128xf32>
    %cst_73 = arith.constant 0.000000e+00 : f32
    %86 = vector.broadcast %cst_73 : f32 to vector<8x128xf32>
    %87 = arith.maximumf %85, %86 : vector<8x128xf32>
    %c16_74 = arith.constant 16 : index
    %c0_75 = arith.constant 0 : index
    %88 = vector.load %arg11[%c16_74, %c0_75] : memref<64x128xf32, #tpu.memory_space<vmem>>, vector<8x128xf32>
    tpu.vector_store %arg11[%c16_74, %c0_75], %87 {strides = array<i32>} : memref<64x128xf32, #tpu.memory_space<vmem>>, vector<8x128xf32>,
    %c48_76 = arith.constant 48 : index
    %c0_77 = arith.constant 0 : index
    %89 = vector.load %arg10[%c48_76, %c0_77] : memref<128x128xf32, #tpu.memory_space<vmem>>, vector<8x128xf32>
    %90 = vector.broadcast %70 : vector<1x128xf32> to vector<8x128xf32>
    %91 = arith.addf %89, %90 : vector<8x128xf32>
    %cst_78 = arith.constant 0.000000e+00 : f32
    %92 = vector.broadcast %cst_78 : f32 to vector<8x128xf32>
    %93 = arith.maximumf %91, %92 : vector<8x128xf32>
    %c24_79 = arith.constant 24 : index
    %c0_80 = arith.constant 0 : index
    %94 = vector.load %arg11[%c24_79, %c0_80] : memref<64x128xf32, #tpu.memory_space<vmem>>, vector<8x128xf32>
    tpu.vector_store %arg11[%c24_79, %c0_80], %93 {strides = array<i32>} : memref<64x128xf32, #tpu.memory_space<vmem>>, vector<8x128xf32>,
    %c64_81 = arith.constant 64 : index
    %c0_82 = arith.constant 0 : index
    %95 = vector.load %arg10[%c64_81, %c0_82] : memref<128x128xf32, #tpu.memory_space<vmem>>, vector<8x128xf32>
    %96 = vector.broadcast %70 : vector<1x128xf32> to vector<8x128xf32>
    %97 = arith.addf %95, %96 : vector<8x128xf32>
    %cst_83 = arith.constant 0.000000e+00 : f32
    %98 = vector.broadcast %cst_83 : f32 to vector<8x128xf32>
    %99 = arith.maximumf %97, %98 : vector<8x128xf32>
    %c32_84 = arith.constant 32 : index
    %c0_85 = arith.constant 0 : index
    %100 = vector.load %arg11[%c32_84, %c0_85] : memref<64x128xf32, #tpu.memory_space<vmem>>, vector<8x128xf32>
    tpu.vector_store %arg11[%c32_84, %c0_85], %99 {strides = array<i32>} : memref<64x128xf32, #tpu.memory_space<vmem>>, vector<8x128xf32>,
    %c80_86 = arith.constant 80 : index
    %c0_87 = arith.constant 0 : index
    %101 = vector.load %arg10[%c80_86, %c0_87] : memref<128x128xf32, #tpu.memory_space<vmem>>, vector<8x128xf32>
    %102 = vector.broadcast %70 : vector<1x128xf32> to vector<8x128xf32>
    %103 = arith.addf %101, %102 : vector<8x128xf32>
    %cst_88 = arith.constant 0.000000e+00 : f32
    %104 = vector.broadcast %cst_88 : f32 to vector<8x128xf32>
    %105 = arith.maximumf %103, %104 : vector<8x128xf32>
    %c40_89 = arith.constant 40 : index
    %c0_90 = arith.constant 0 : index
    %106 = vector.load %arg11[%c40_89, %c0_90] : memref<64x128xf32, #tpu.memory_space<vmem>>, vector<8x128xf32>
    tpu.vector_store %arg11[%c40_89, %c0_90], %105 {strides = array<i32>} : memref<64x128xf32, #tpu.memory_space<vmem>>, vector<8x128xf32>,
    %c96_91 = arith.constant 96 : index
    %c0_92 = arith.constant 0 : index
    %107 = vector.load %arg10[%c96_91, %c0_92] : memref<128x128xf32, #tpu.memory_space<vmem>>, vector<8x128xf32>
    %108 = vector.broadcast %70 : vector<1x128xf32> to vector<8x128xf32>
    %109 = arith.addf %107, %108 : vector<8x128xf32>
    %cst_93 = arith.constant 0.000000e+00 : f32
    %110 = vector.broadcast %cst_93 : f32 to vector<8x128xf32>
    %111 = arith.maximumf %109, %110 : vector<8x128xf32>
    %c48_94 = arith.constant 48 : index
    %c0_95 = arith.constant 0 : index
    %112 = vector.load %arg11[%c48_94, %c0_95] : memref<64x128xf32, #tpu.memory_space<vmem>>, vector<8x128xf32>
    tpu.vector_store %arg11[%c48_94, %c0_95], %111 {strides = array<i32>} : memref<64x128xf32, #tpu.memory_space<vmem>>, vector<8x128xf32>,
    %c112_96 = arith.constant 112 : index
    %c0_97 = arith.constant 0 : index
    %113 = vector.load %arg10[%c112_96, %c0_97] : memref<128x128xf32, #tpu.memory_space<vmem>>, vector<8x128xf32>
    %114 = vector.broadcast %70 : vector<1x128xf32> to vector<8x128xf32>
    %115 = arith.addf %113, %114 : vector<8x128xf32>
    %cst_98 = arith.constant 0.000000e+00 : f32
    %116 = vector.broadcast %cst_98 : f32 to vector<8x128xf32>
    %117 = arith.maximumf %115, %116 : vector<8x128xf32>
    %c56_99 = arith.constant 56 : index
    %c0_100 = arith.constant 0 : index
    %118 = vector.load %arg11[%c56_99, %c0_100] : memref<64x128xf32, #tpu.memory_space<vmem>>, vector<8x128xf32>
    tpu.vector_store %arg11[%c56_99, %c0_100], %117 {strides = array<i32>} : memref<64x128xf32, #tpu.memory_space<vmem>>, vector<8x128xf32>,
    %c0_101 = arith.constant 0 : index
    %c0_102 = arith.constant 0 : index
    %119 = vector.load %arg11[%c0_101, %c0_102] : memref<64x128xf32, #tpu.memory_space<vmem>>, vector<64x128xf32>
    %120 = arith.truncf %119 : vector<64x128xf32> to vector<64x128xbf16>
    %c0_103 = arith.constant 0 : index
    %c0_104 = arith.constant 0 : index
    %121 = vector.load %arg4[%c0_103, %c0_104] : memref<128x128xbf16, #tpu.memory_space<vmem>>, vector<128x128xbf16>
    %cst_105 = arith.constant dense<0.000000e+00> : vector<64x128xf32>
    %122 = tpu.matmul %120, %121, %cst_105 {dimension_numbers = #tpu.dot_dimension_numbers<[1], [0], [0], [1], [0, 0, 1, 1], [], []>} : vector<64x128xbf16>, vector<128x128xbf16>, vector<64x128xf32> -> vector<64x128xf32>
    %c0_106 = arith.constant 0 : index
    %c0_107 = arith.constant 0 : index
    %123 = vector.load %arg7[%c0_106, %c0_107] : memref<1x128xf32, #tpu.memory_space<vmem>>, vector<1x128xf32>
    %124 = vector.broadcast %123 : vector<1x128xf32> to vector<64x128xf32>
    %125 = arith.addf %122, %124 : vector<64x128xf32>
    %c0_108 = arith.constant 0 : index
    %c0_109 = arith.constant 0 : index
    %c0_110 = arith.constant 0 : index
    %126 = vector.load %arg1[%c0_108, %c0_109, %c0_110] : memref<1x64x128xf32, #tpu.memory_space<vmem>>, vector<1x64x128xf32>
    %127 = vector.shape_cast %126 : vector<1x64x128xf32> to vector<64x128xf32>
    %128 = arith.addf %125, %127 : vector<64x128xf32>
    %cst_111 = arith.constant 0.000000e+00 : f32
    %129 = vector.broadcast %cst_111 : f32 to vector<64x128xf32>
    %130 = arith.maximumf %128, %129 : vector<64x128xf32>
    %131 = arith.truncf %130 : vector<64x128xf32> to vector<64x128xbf16>
    %c0_112 = arith.constant 0 : index
    %c0_113 = arith.constant 0 : index
    %c0_114 = arith.constant 0 : index
    %132 = vector.load %arg8[%c0_112, %c0_113, %c0_114] : memref<1x64x128xbf16, #tpu.memory_space<vmem>>, vector<1x64x128xbf16>
    %133 = vector.shape_cast %132 : vector<1x64x128xbf16> to vector<64x128xbf16>
    %134 = vector.shape_cast %131 : vector<64x128xbf16> to vector<1x64x128xbf16>
    tpu.vector_store %arg8[%c0_112, %c0_113, %c0_114], %134 {strides = array<i32>} : memref<1x64x128xbf16, #tpu.memory_space<vmem>>, vector<1x64x128xbf16>,
    return
  }
  func.func @transform_0(%arg0: i32) -> (i32, i32, i32) {
    %c0_i32 = arith.constant 0 : i32
    %c0_i32_0 = arith.constant 0 : i32
    %c0_i32_1 = arith.constant 0 : i32
    return %arg0, %c0_i32, %c0_i32_0 : i32, i32, i32
  }
  func.func @transform_1(%arg0: i32) -> (i32, i32) {
    %c0_i32 = arith.constant 0 : i32
    %c0_i32_0 = arith.constant 0 : i32
    %c0_i32_1 = arith.constant 0 : i32
    return %c0_i32, %c0_i32_0 : i32, i32
  }
  func.func @transform_2(%arg0: i32) -> (i32, i32, i32) {
    %c0_i32 = arith.constant 0 : i32
    %c0_i32_0 = arith.constant 0 : i32
    %c0_i32_1 = arith.constant 0 : i32
    %c0_i32_2 = arith.constant 0 : i32
    return %c0_i32, %c0_i32_0, %c0_i32_1 : i32, i32, i32
  }
  func.func @transform_3(%arg0: i32) -> (i32, i32) {
    %c0_i32 = arith.constant 0 : i32
    %c0_i32_0 = arith.constant 0 : i32
    %c0_i32_1 = arith.constant 0 : i32
    return %c0_i32, %c0_i32_0 : i32, i32
  }
  func.func @transform_4(%arg0: i32) -> (i32, i32) {
    %c0_i32 = arith.constant 0 : i32
    %c0_i32_0 = arith.constant 0 : i32
    %c0_i32_1 = arith.constant 0 : i32
    return %c0_i32, %c0_i32_0 : i32, i32
  }
  func.func @transform_5(%arg0: i32) -> (i32, i32) {
    %c0_i32 = arith.constant 0 : i32
    %c0_i32_0 = arith.constant 0 : i32
    %c0_i32_1 = arith.constant 0 : i32
    return %c0_i32, %c0_i32_0 : i32, i32
  }
  func.func @transform_6(%arg0: i32) -> (i32, i32) {
    %c0_i32 = arith.constant 0 : i32
    %c0_i32_0 = arith.constant 0 : i32
    %c0_i32_1 = arith.constant 0 : i32
    return %c0_i32, %c0_i32_0 : i32, i32
  }
  func.func @transform_7(%arg0: i32) -> (i32, i32, i32) {
    %c0_i32 = arith.constant 0 : i32
    %c0_i32_0 = arith.constant 0 : i32
    %c0_i32_1 = arith.constant 0 : i32
    return %arg0, %c0_i32, %c0_i32_0 : i32, i32, i32
  }
}

</mosaic_0001>

<llo_original>
// kernel: bottleneck_forward.1
$region0: #{bottleneck_forward.1}
  #allocation0 [shape = 'u32[]', space=smem, size = 0x4, offset = 0x4, fixed_abs, tag = 'smem constant byte address 0x4 - core index']
  #allocation1 [shape = 'u32[72,128]{1,0:T(1,128)}', space=vmem, size = 0x9000, scoped, tag = 'internal scratch']
  #allocation2 [shape = 'f32[176,128]{1,0:T(8,128)}', space=vmem, size = 0x16000, scoped, tag = 'scratch operand']
  #allocation3 [shape = 'f32[128,128]{1,0:T(8,128)}', space=vmem, size = 0x10000, scoped, tag = 'scratch operand']
  #allocation4 [shape = 'f32[64,128]{1,0:T(8,128)}', space=vmem, size = 0x8000, scoped, tag = 'scratch operand']
  %s0 = inlined_call_operand.vmem [shape: f32[2,64,128], index: 0, kind: input, shape index: {}]
  %s1 = inlined_call_operand.vmem [shape: bf16[128,128], index: 1, kind: input, shape index: {}]
  %s2 = inlined_call_operand.vmem [shape: bf16[3,384,128], index: 2, kind: input, shape index: {}]
  %s3 = inlined_call_operand.vmem [shape: bf16[128,128], index: 3, kind: input, shape index: {}]
  %s4 = inlined_call_operand.vmem [shape: f32[1,128], index: 4, kind: input, shape index: {}]
  %s5 = inlined_call_operand.vmem [shape: f32[1,128], index: 5, kind: input, shape index: {}]
  %s6 = inlined_call_operand.vmem [shape: f32[1,128], index: 6, kind: input, shape index: {}]
  %s7 = inlined_call_operand.hbm [shape: bf16[2,64,128], index: 7, kind: output, shape index: {}]
  %s8 = sld [smem:[#allocation0]]
  $region61: #{bottleneck_forward.1} parent=0
    _
  %s10 = ssub.s32 1, %s8
  %s11 = scalar_select 0, %s10, %s8
  $region1: #{bottleneck_forward.1} parent=0
    #allocation5 [shape = 'u8[32768]{0}', space=vmem, size = 0x8000, scoped, tag = 'output window, operand 0']
    #allocation6 [shape = 's32[2]{0}', space=sflag, size = 0x8, scoped, tag = 'scoped memory for bottleneck_forward.1']
    %12 = vsyncpa [#allocation6], 0
    %s13 = scalar_lea.sflag [#allocation6], 1
    %14 = vsyncpa %s13, 0
    loop: start=0, step=1, limit=4
    $region2: #{bottleneck_forward.1} parent=1 // loop_pre_header
      _
    $region3: #{bottleneck_forward.1} parent=1 // loop_header
      %s16 = sphi 0, %s20
      %p17 = scmp.ge.s32.totalorder %s16, 4
      %s26 = sphi 0, %s28
      %s29 = sphi 0, %s26
      %s30 = sphi 0, %s29
      %s46 = sphi 0, %s30
      %s50 = sphi 0, %s50
      %s52 = sphi 0, %s50
      %s53 = sphi 0, %s52
      %s67 = sphi 0, %s53
      %s71 = sphi 0, %s71
      %s73 = sphi 0, %s71
      %s74 = sphi 0, %s73
      %s88 = sphi 0, %s74
      %s92 = sphi 0, %s92
      %s94 = sphi 0, %s92
      %s95 = sphi 0, %s94
      %s109 = sphi 0, %s95
      %s113 = sphi 0, %s113
      %s115 = sphi 0, %s113
      %s116 = sphi 0, %s115
      %s130 = sphi 0, %s116
      %s134 = sphi 0, %s134
      %s136 = sphi 0, %s134
      %s137 = sphi 0, %s136
      %s151 = sphi 0, %s137
      %s155 = sphi 0, %s155
      %s157 = sphi 0, %s155
      %s158 = sphi 0, %s157
      %s172 = sphi 0, %s158
      %s178 = sphi 0, %s180
      %s181 = sphi 0, %s178
      %s182 = sphi 0, %s181
      %s198 = sphi 0, %s182
    $region4: #{bottleneck_forward.1} parent=1 // loop_header_branch
      %19 = sbr.rel (%p17) target = $region8
    $region5: #{bottleneck_forward.1} parent=1 // loop_body
      %s21 = ssub.s32 %s16, 1
      %s22 = ssub.s32 %s16, 2
      %s23 = sadd.s32 %s16, 1
      %s24 = ssub.s32 %s16, %s23
      %p25 = scmp.eq.s32.totalorder %s24, 0
      %s27 = sadd.s32 %s26, 1
      %s28 = scalar_select %p25, %s26, %s27
      %p31 = pneg %p25
      %p32 = scmp.eq.s32.totalorder %s16, 1
      %p33 = por %p31, %p32
      %p34 = scmp.ne.s32.totalorder %s26, %s29
      %p35 = scmp.eq.s32.totalorder %s16, 0
      %p36 = por %p34, %p35
      %p37 = scmp.ne.s32.totalorder %s26, %s29
      %p38 = scmp.eq.s32.totalorder %s21, 1
      %p39 = por %p37, %p38
      %p40 = scmp.ne.s32.totalorder %s29, %s30
      %p41 = scmp.eq.s32.totalorder %s21, 0
      %p42 = por %p40, %p41
      %p43 = scmp.ne.s32.totalorder %s29, %s30
      %p44 = scmp.eq.s32.totalorder %s22, 1
      %p45 = por %p43, %p44
      %p47 = scmp.ne.s32.totalorder %s30, %s46
      %p48 = scmp.eq.s32.totalorder %s22, 0
      %p49 = por %p47, %p48
      %s51 = sadd.s32 %s50, 1
      %p54 = scmp.eq.s32.totalorder %s16, 1
      %p55 = scmp.ne.s32.totalorder %s50, %s52
      %p56 = scmp.eq.s32.totalorder %s16, 0
      %p57 = por %p55, %p56
      %p58 = scmp.ne.s32.totalorder %s50, %s52
      %p59 = scmp.eq.s32.totalorder %s21, 1
      %p60 = por %p58, %p59
      %p61 = scmp.ne.s32.totalorder %s52, %s53
      %p62 = scmp.eq.s32.totalorder %s21, 0
      %p63 = por %p61, %p62
      %p64 = scmp.ne.s32.totalorder %s52, %s53
      %p65 = scmp.eq.s32.totalorder %s22, 1
      %p66 = por %p64, %p65
      %p68 = scmp.ne.s32.totalorder %s53, %s67
      %p69 = scmp.eq.s32.totalorder %s22, 0
      %p70 = por %p68, %p69
      %s72 = sadd.s32 %s71, 1
      %p75 = scmp.eq.s32.totalorder %s16, 1
      %p76 = scmp.ne.s32.totalorder %s71, %s73
      %p77 = scmp.eq.s32.totalorder %s16, 0
      %p78 = por %p76, %p77
      %p79 = scmp.ne.s32.totalorder %s71, %s73
      %p80 = scmp.eq.s32.totalorder %s21, 1
      %p81 = por %p79, %p80
      %p82 = scmp.ne.s32.totalorder %s73, %s74
      %p83 = scmp.eq.s32.totalorder %s21, 0
      %p84 = por %p82, %p83
      %p85 = scmp.ne.s32.totalorder %s73, %s74
      %p86 = scmp.eq.s32.totalorder %s22, 1
      %p87 = por %p85, %p86
      %p89 = scmp.ne.s32.totalorder %s74, %s88
      %p90 = scmp.eq.s32.totalorder %s22, 0
      %p91 = por %p89, %p90
      %s93 = sadd.s32 %s92, 1
      %p96 = scmp.eq.s32.totalorder %s16, 1
      %p97 = scmp.ne.s32.totalorder %s92, %s94
      %p98 = scmp.eq.s32.totalorder %s16, 0
      %p99 = por %p97, %p98
      %p100 = scmp.ne.s32.totalorder %s92, %s94
      %p101 = scmp.eq.s32.totalorder %s21, 1
      %p102 = por %p100, %p101
      %p103 = scmp.ne.s32.totalorder %s94, %s95
      %p104 = scmp.eq.s32.totalorder %s21, 0
      %p105 = por %p103, %p104
      %p106 = scmp.ne.s32.totalorder %s94, %s95
      %p107 = scmp.eq.s32.totalorder %s22, 1
      %p108 = por %p106, %p107
      %p110 = scmp.ne.s32.totalorder %s95, %s109
      %p111 = scmp.eq.s32.totalorder %s22, 0
      %p112 = por %p110, %p111
      %s114 = sadd.s32 %s113, 1
      %p117 = scmp.eq.s32.totalorder %s16, 1
      %p118 = scmp.ne.s32.totalorder %s113, %s115
      %p119 = scmp.eq.s32.totalorder %s16, 0
      %p120 = por %p118, %p119
      %p121 = scmp.ne.s32.totalorder %s113, %s115
      %p122 = scmp.eq.s32.totalorder %s21, 1
      %p123 = por %p121, %p122
      %p124 = scmp.ne.s32.totalorder %s115, %s116
      %p125 = scmp.eq.s32.totalorder %s21, 0
      %p126 = por %p124, %p125
      %p127 = scmp.ne.s32.totalorder %s115, %s116
      %p128 = scmp.eq.s32.totalorder %s22, 1
      %p129 = por %p127, %p128
      %p131 = scmp.ne.s32.totalorder %s116, %s130
      %p132 = scmp.eq.s32.totalorder %s22, 0
      %p133 = por %p131, %p132
      %s135 = sadd.s32 %s134, 1
      %p138 = scmp.eq.s32.totalorder %s16, 1
      %p139 = scmp.ne.s32.totalorder %s134, %s136
      %p140 = scmp.eq.s32.totalorder %s16, 0
      %p141 = por %p139, %p140
      %p142 = scmp.ne.s32.totalorder %s134, %s136
      %p143 = scmp.eq.s32.totalorder %s21, 1
      %p144 = por %p142, %p143
      %p145 = scmp.ne.s32.totalorder %s136, %s137
      %p146 = scmp.eq.s32.totalorder %s21, 0
      %p147 = por %p145, %p146
      %p148 = scmp.ne.s32.totalorder %s136, %s137
      %p149 = scmp.eq.s32.totalorder %s22, 1
      %p150 = por %p148, %p149
      %p152 = scmp.ne.s32.totalorder %s137, %s151
      %p153 = scmp.eq.s32.totalorder %s22, 0
      %p154 = por %p152, %p153
      %s156 = sadd.s32 %s155, 1
      %p159 = scmp.eq.s32.totalorder %s16, 1
      %p160 = scmp.ne.s32.totalorder %s155, %s157
      %p161 = scmp.eq.s32.totalorder %s16, 0
      %p162 = por %p160, %p161
      %p163 = scmp.ne.s32.totalorder %s155, %s157
      %p164 = scmp.eq.s32.totalorder %s21, 1
      %p165 = por %p163, %p164
      %p166 = scmp.ne.s32.totalorder %s157, %s158
      %p167 = scmp.eq.s32.totalorder %s21, 0
      %p168 = por %p166, %p167
      %p169 = scmp.ne.s32.totalorder %s157, %s158
      %p170 = scmp.eq.s32.totalorder %s22, 1
      %p171 = por %p169, %p170
      %p173 = scmp.ne.s32.totalorder %s158, %s172
      %p174 = scmp.eq.s32.totalorder %s22, 0
      %p175 = por %p173, %p174
      %s176 = ssub.s32 %s16, %s23
      %p177 = scmp.eq.s32.totalorder %s176, 0
      %s179 = sadd.s32 %s178, 1
      %s180 = scalar_select %p177, %s178, %s179
      %p183 = pneg %p177
      %p184 = scmp.eq.s32.totalorder %s16, 1
      %p185 = por %p183, %p184
      %p186 = scmp.ne.s32.totalorder %s178, %s181
      %p187 = scmp.eq.s32.totalorder %s16, 0
      %p188 = por %p186, %p187
      %p189 = scmp.ne.s32.totalorder %s178, %s181
      %p190 = scmp.eq.s32.totalorder %s21, 1
      %p191 = por %p189, %p190
      %p192 = scmp.ne.s32.totalorder %s181, %s182
      %p193 = scmp.eq.s32.totalorder %s21, 0
      %p194 = por %p192, %p193
      %p195 = scmp.ne.s32.totalorder %s181, %s182
      %p196 = scmp.eq.s32.totalorder %s22, 1
      %p197 = por %p195, %p196
      %p199 = scmp.ne.s32.totalorder %s182, %s198
      %p200 = scmp.eq.s32.totalorder %s22, 0
      %p201 = por %p199, %p200
      %p202 = scmp.le.s32.totalorder 1, %s16
      %p203 = scmp.lt.s32.totalorder %s16, 3
      %p204 = pnand %p202, %p203
      %p205 = pneg %p204
      // Predicated region
      $region9: #{bottleneck_forward.1} parent=5 // pred_check
        _
      $region10: #{bottleneck_forward.1} parent=5 // pred_check_branch
        %207 = sbr.rel (%p204) target = $region12
      $region11: #{bottleneck_forward.1} parent=5 // pred_region
        %s208 = ssub.s32 %s16, 1
        // Predicated region
        $region13: #{bottleneck_forward.1} parent=11 // pred_check
          %p209 = pneg %p63
        $region14: #{bottleneck_forward.1} parent=11 // pred_check_branch
          %211 = sbr.rel (%p209) target = $region16
        $region15: #{bottleneck_forward.1} parent=11 // pred_region
          _
        $region16: #{bottleneck_forward.1} parent=11 // pred_fallthru
          _
        // Predicated region
        $region17: #{bottleneck_forward.1} parent=11 // pred_check
          %p212 = pneg %p84
        $region18: #{bottleneck_forward.1} parent=11 // pred_check_branch
          %214 = sbr.rel (%p212) target = $region20
        $region19: #{bottleneck_forward.1} parent=11 // pred_region
          _
        $region20: #{bottleneck_forward.1} parent=11 // pred_fallthru
          _
        // Predicated region
        $region21: #{bottleneck_forward.1} parent=11 // pred_check
          %p215 = pneg %p105
        $region22: #{bottleneck_forward.1} parent=11 // pred_check_branch
          %217 = sbr.rel (%p215) target = $region24
        $region23: #{bottleneck_forward.1} parent=11 // pred_region
          _
        $region24: #{bottleneck_forward.1} parent=11 // pred_fallthru
          _
        // Predicated region
        $region25: #{bottleneck_forward.1} parent=11 // pred_check
          %p218 = pneg %p126
        $region26: #{bottleneck_forward.1} parent=11 // pred_check_branch
          %220 = sbr.rel (%p218) target = $region28
        $region27: #{bottleneck_forward.1} parent=11 // pred_region
          _
        $region28: #{bottleneck_forward.1} parent=11 // pred_fallthru
          _
        // Predicated region
        $region29: #{bottleneck_forward.1} parent=11 // pred_check
          %p221 = pneg %p147
        $region30: #{bottleneck_forward.1} parent=11 // pred_check_branch
          %223 = sbr.rel (%p221) target = $region32
        $region31: #{bottleneck_forward.1} parent=11 // pred_region
          _
        $region32: #{bottleneck_forward.1} parent=11 // pred_fallthru
          _
        // Predicated region
        $region33: #{bottleneck_forward.1} parent=11 // pred_check
          %p224 = pneg %p168
        $region34: #{bottleneck_forward.1} parent=11 // pred_check_branch
          %226 = sbr.rel (%p224) target = $region36
        $region35: #{bottleneck_forward.1} parent=11 // pred_region
          _
        $region36: #{bottleneck_forward.1} parent=11 // pred_fallthru
          _
      $region12: #{bottleneck_forward.1} parent=5 // pred_fallthru
        _
      %p227 = scmp.lt.s32.totalorder %s16, 2
      // Predicated region
      $region37: #{bottleneck_forward.1} parent=5 // pred_check
        %p228 = pneg %p227
      $region38: #{bottleneck_forward.1} parent=5 // pred_check_branch
        %230 = sbr.rel (%p228) target = $region40
      $region39: #{bottleneck_forward.1} parent=5 // pred_region
        // Predicated region
        $region41: #{bottleneck_forward.1} parent=39 // pred_check
          %p231 = pneg %p36
        $region42: #{bottleneck_forward.1} parent=39 // pred_check_branch
          %233 = sbr.rel (%p231) target = $region44
        $region43: #{bottleneck_forward.1} parent=39 // pred_region
          %p234 = scmp.lt.s32.totalorder %s16, 1
          %s235 = scalar_select %p234, %s16, 1
          %s236 = smul.addr %s235, 8
          %s237 = smul.addr %s236, 8
          %s238 = scalar_lea.vmem %s0, %s237
        $region44: #{bottleneck_forward.1} parent=39 // pred_fallthru
          _
      $region40: #{bottleneck_forward.1} parent=5 // pred_fallthru
        _
      %p239 = scmp.le.s32.totalorder 1, %s16
      %p240 = scmp.lt.s32.totalorder %s16, 3
      %p241 = pnand %p239, %p240
      %p242 = pneg %p241
      // Predicated region
      $region45: #{bottleneck_forward.1} parent=5 // pred_check
        _
      $region46: #{bottleneck_forward.1} parent=5 // pred_check_branch
        %244 = sbr.rel (%p241) target = $region48
      $region47: #{bottleneck_forward.1} parent=5 // pred_region
        %s245 = ssub.s32 %s16, 1
        %p246 = scmp.lt.s32.totalorder %s21, 1
        %s247 = scalar_select %p246, %s21, 1
        %s248 = smul.addr %s247, 8
        %s249 = smul.addr %s248, 8
        %s250 = scalar_lea.vmem %s0, %s249
        %p251 = pneg %p42
        %p252 = pneg %p39
        %p253 = pneg %p63
        %p254 = pneg %p60
        %p255 = pneg %p84
        %p256 = pneg %p81
        %p257 = pneg %p105
        %p258 = pneg %p102
        %p259 = pneg %p126
        %p260 = pneg %p123
        %p261 = pneg %p147
        %p262 = pneg %p144
        %p263 = pneg %p168
        %p264 = pneg %p165
        %p265 = pneg %p194
        %p266 = pneg %p191
        %s267 = sand.u32 %s181, 1
        %s268 = scalar_lea.sflag [#allocation6], %s267
        %s269 = sand.u32 %s181, 1
        %s270 = smul.addr %s269, 32
        %s271 = scalar_lea.vmem [#allocation5], %s270
        %p272 = scmp.lt.s32.totalorder %s21, 1
        %s273 = scalar_select %p272, %s21, 1
        %s274 = smul.addr %s273, 8
        %s275 = smul.addr %s274, 8
        %s276 = scalar_lea.vmem %s0, %s275
        %v277 = vld [vmem:[%s276] sm:$0xff]
        %v278 = vld [vmem:[%s276 + $0x8] sm:$0xff]
        %v279 = vld [vmem:[%s276 + $0x10] sm:$0xff]
        %v280 = vld [vmem:[%s276 + $0x18] sm:$0xff]
        %v281 = vld [vmem:[%s276 + $0x20] sm:$0xff]
        %v282 = vld [vmem:[%s276 + $0x28] sm:$0xff]
        %v283 = vld [vmem:[%s276 + $0x30] sm:$0xff]
        %v284 = vld [vmem:[%s276 + $0x38] sm:$0xff]
        %v285 = vpack.c.bf16 %v278, %v277
        %v286 = vpack.c.bf16 %v280, %v279
        %v287 = vpack.c.bf16 %v282, %v281
        %v288 = vpack.c.bf16 %v284, %v283
        %v289 = vld [vmem:[%s1] sm:$0xf]
        %v290 = vld [vmem:[%s1 + $0x4] sm:$0xf]
        %v291 = vld [vmem:[%s1 + $0x8] sm:$0xf]
        %v292 = vld [vmem:[%s1 + $0xc] sm:$0xf]
        %v293 = vld [vmem:[%s1 + $0x10] sm:$0xf]
        %v294 = vld [vmem:[%s1 + $0x14] sm:$0xf]
        %v295 = vld [vmem:[%s1 + $0x18] sm:$0xf]
        %v296 = vld [vmem:[%s1 + $0x1c] sm:$0xf]
        %v297 = vld [vmem:[%s1 + $0x20] sm:$0xf]
        %v298 = vld [vmem:[%s1 + $0x24] sm:$0xf]
        %v299 = vld [vmem:[%s1 + $0x28] sm:$0xf]
        %v300 = vld [vmem:[%s1 + $0x2c] sm:$0xf]
        %v301 = vld [vmem:[%s1 + $0x30] sm:$0xf]
        %v302 = vld [vmem:[%s1 + $0x34] sm:$0xf]
        %v303 = vld [vmem:[%s1 + $0x38] sm:$0xf]
        %v304 = vld [vmem:[%s1 + $0x3c] sm:$0xf]
        %v305 = vld [vmem:[%s4] sm:$0x1]
        %v307 = vperm.slane %v305, 0
        %v325 = vunpack.c.l.b16 %v289
        %v326 = vunpack.c.l.b16 %v290
        %v327 = vunpack.c.l.b16 %v291
        %v328 = vunpack.c.l.b16 %v292
        %v329 = vunpack.c.l.b16 %v293
        %v330 = vunpack.c.l.b16 %v294
        %v331 = vunpack.c.l.b16 %v295
        %v332 = vunpack.c.l.b16 %v296
        %v333 = vunpack.c.l.b16 %v297
        %v334 = vunpack.c.l.b16 %v298
        %v335 = vunpack.c.l.b16 %v299
        %v336 = vunpack.c.l.b16 %v300
        %v337 = vunpack.c.l.b16 %v301
        %v338 = vunpack.c.l.b16 %v302
        %v339 = vunpack.c.l.b16 %v303
        %v340 = vunpack.c.l.b16 %v304
        %v341 = vpack.c.b16 %v326, %v325
        %v342 = vpack.c.b16 %v328, %v327
        %v343 = vpack.c.b16 %v330, %v329
        %v344 = vpack.c.b16 %v332, %v331
        %v345 = vpack.c.b16 %v334, %v333
        %v346 = vpack.c.b16 %v336, %v335
        %v347 = vpack.c.b16 %v338, %v337
        %v348 = vpack.c.b16 %v340, %v339
        %357 = vmatpush.bf16.msra.mxu0 %v348
        %358 = vmatpush.bf16.msra.mxu0 %v347
        %359 = vmatpush.bf16.msra.mxu0 %v346
        %360 = vmatpush.bf16.msra.mxu0 %v345
        %361 = vmatpush.bf16.msra.mxu0 %v344
        %362 = vmatpush.bf16.msra.mxu0 %v343
        %363 = vmatpush.bf16.msra.mxu0 %v342
        %364 = vmatpush.bf16.msra.mxu0 %v341
        %365 = vmatmul.bf16.gmra.mxu0 %v285
        %v366 = vpop.f32.mrf.mxu0
        %v367 = vadd.f32 %v307, %v366
        %v368 = vpop.f32.mrf.mxu0
        %v369 = vadd.f32 %v307, %v368
        %370 = vmatmul.bf16.gmra.mxu0 %v286
        %v371 = vpop.f32.mrf.mxu0
        %v372 = vadd.f32 %v307, %v371
        %v373 = vpop.f32.mrf.mxu0
        %v374 = vadd.f32 %v307, %v373
        %375 = vmatmul.bf16.gmra.mxu0 %v287
        %v376 = vpop.f32.mrf.mxu0
        %v377 = vadd.f32 %v307, %v376
        %v378 = vpop.f32.mrf.mxu0
        %v379 = vadd.f32 %v307, %v378
        %380 = vmatmul.bf16.gmra.mxu0 %v288
        %v381 = vpop.f32.mrf.mxu0
        %v382 = vadd.f32 %v307, %v381
        %v383 = vpop.f32.mrf.mxu0
        %v384 = vadd.f32 %v307, %v383
        %385 = vdwg.mxu0
        %v386 = vmax.f32 %v367, 0.0
        %v387 = vmax.f32 %v369, 0.0
        %v388 = vmax.f32 %v372, 0.0
        %v389 = vmax.f32 %v374, 0.0
        %v390 = vmax.f32 %v377, 0.0
        %v391 = vmax.f32 %v379, 0.0
        %v392 = vmax.f32 %v382, 0.0
        %v393 = vmax.f32 %v384, 0.0
        %394 = vst [vmem:[#allocation2] sm:$0xff] 0.0
        %395 = vst [vmem:[#allocation2 + $0x8] sm:$0xff] 0.0
        %396 = vst [vmem:[#allocation2 + $0x10] sm:$0xff] 0.0
        %397 = vst [vmem:[#allocation2 + $0x98] sm:$0xff] 0.0
        %398 = vst [vmem:[#allocation2 + $0xa0] sm:$0xff] 0.0
        %399 = vst [vmem:[#allocation2 + $0xa8] sm:$0xff] 0.0
        %400 = vst [vmem:[#allocation2 + $0x18] sm:$0xff] %v386
        %401 = vst [vmem:[#allocation2 + $0x20] sm:$0xff] 0.0
        %402 = vst [vmem:[#allocation2 + $0x28] sm:$0xff] %v387
        %403 = vst [vmem:[#allocation2 + $0x30] sm:$0xff] 0.0
        %404 = vst [vmem:[#allocation2 + $0x38] sm:$0xff] %v388
        %405 = vst [vmem:[#allocation2 + $0x40] sm:$0xff] 0.0
        %406 = vst [vmem:[#allocation2 + $0x48] sm:$0xff] %v389
        %407 = vst [vmem:[#allocation2 + $0x50] sm:$0xff] 0.0
        %408 = vst [vmem:[#allocation2 + $0x58] sm:$0xff] %v390
        %409 = vst [vmem:[#allocation2 + $0x60] sm:$0xff] 0.0
        %410 = vst [vmem:[#allocation2 + $0x68] sm:$0xff] %v391
        %411 = vst [vmem:[#allocation2 + $0x70] sm:$0xff] 0.0
        %412 = vst [vmem:[#allocation2 + $0x78] sm:$0xff] %v392
        %413 = vst [vmem:[#allocation2 + $0x80] sm:$0xff] 0.0
        %414 = vst [vmem:[#allocation2 + $0x88] sm:$0xff] %v393
        %415 = vst [vmem:[#allocation2 + $0x90] sm:$0xff] 0.0
        %v416 = vld [vmem:[#allocation2 + $0x7] sm:$0xff]
        %v417 = vld [vmem:[#allocation2 + $0xf] sm:$0xff]
        %v418 = vld [vmem:[#allocation2 + $0x17] sm:$0xff]
        %v419 = vld [vmem:[#allocation2 + $0x1f] sm:$0xff]
        %v420 = vld [vmem:[#allocation2 + $0x27] sm:$0xff]
        %v421 = vld [vmem:[#allocation2 + $0x2f] sm:$0xff]
        %v422 = vld [vmem:[#allocation2 + $0x37] sm:$0xff]
        %v423 = vld [vmem:[#allocation2 + $0x3f] sm:$0xff]
        %v424 = vld [vmem:[#allocation2 + $0x47] sm:$0xff]
        %v425 = vld [vmem:[#allocation2 + $0x4f] sm:$0xff]
        %v426 = vld [vmem:[#allocation2 + $0x57] sm:$0xff]
        %v427 = vld [vmem:[#allocation2 + $0x5f] sm:$0xff]
        %v428 = vld [vmem:[#allocation2 + $0x67] sm:$0xff]
        %v429 = vld [vmem:[#allocation2 + $0x6f] sm:$0xff]
        %v430 = vld [vmem:[#allocation2 + $0x77] sm:$0xff]
        %v431 = vld [vmem:[#allocation2 + $0x7f] sm:$0xff]
        %v432 = vld [vmem:[#allocation2 + $0x8] sm:$0xff]
        %v433 = vld [vmem:[#allocation2 + $0x10] sm:$0xff]
        %v434 = vld [vmem:[#allocation2 + $0x18] sm:$0xff]
        %v435 = vld [vmem:[#allocation2 + $0x20] sm:$0xff]
        %v436 = vld [vmem:[#allocation2 + $0x28] sm:$0xff]
        %v437 = vld [vmem:[#allocation2 + $0x30] sm:$0xff]
        %v438 = vld [vmem:[#allocation2 + $0x38] sm:$0xff]
        %v439 = vld [vmem:[#allocation2 + $0x40] sm:$0xff]
        %v440 = vld [vmem:[#allocation2 + $0x48] sm:$0xff]
        %v441 = vld [vmem:[#allocation2 + $0x50] sm:$0xff]
        %v442 = vld [vmem:[#allocation2 + $0x58] sm:$0xff]
        %v443 = vld [vmem:[#allocation2 + $0x60] sm:$0xff]
        %v444 = vld [vmem:[#allocation2 + $0x68] sm:$0xff]
        %v445 = vld [vmem:[#allocation2 + $0x70] sm:$0xff]
        %v446 = vld [vmem:[#allocation2 + $0x78] sm:$0xff]
        %v447 = vld [vmem:[#allocation2 + $0x80] sm:$0xff]
        %v448 = vld [vmem:[#allocation2 + $0x9] sm:$0xff]
        %v449 = vld [vmem:[#allocation2 + $0x11] sm:$0xff]
        %v450 = vld [vmem:[#allocation2 + $0x19] sm:$0xff]
        %v451 = vld [vmem:[#allocation2 + $0x21] sm:$0xff]
        %v452 = vld [vmem:[#allocation2 + $0x29] sm:$0xff]
        %v453 = vld [vmem:[#allocation2 + $0x31] sm:$0xff]
        %v454 = vld [vmem:[#allocation2 + $0x39] sm:$0xff]
        %v455 = vld [vmem:[#allocation2 + $0x41] sm:$0xff]
        %v456 = vld [vmem:[#allocation2 + $0x49] sm:$0xff]
        %v457 = vld [vmem:[#allocation2 + $0x51] sm:$0xff]
        %v458 = vld [vmem:[#allocation2 + $0x59] sm:$0xff]
        %v459 = vld [vmem:[#allocation2 + $0x61] sm:$0xff]
        %v460 = vld [vmem:[#allocation2 + $0x69] sm:$0xff]
        %v461 = vld [vmem:[#allocation2 + $0x71] sm:$0xff]
        %v462 = vld [vmem:[#allocation2 + $0x79] sm:$0xff]
        %v463 = vld [vmem:[#allocation2 + $0x81] sm:$0xff]
        %v464 = vpack.c.bf16 %v417, %v416
        %v465 = vpack.c.bf16 %v433, %v432
        %v466 = vpack.c.bf16 %v449, %v448
        %v467 = vpack.c.bf16 %v419, %v418
        %v468 = vpack.c.bf16 %v435, %v434
        %v469 = vpack.c.bf16 %v451, %v450
        %v470 = vpack.c.bf16 %v421, %v420
        %v471 = vpack.c.bf16 %v437, %v436
        %v472 = vpack.c.bf16 %v453, %v452
        %v473 = vpack.c.bf16 %v423, %v422
        %v474 = vpack.c.bf16 %v439, %v438
        %v475 = vpack.c.bf16 %v455, %v454
        %v476 = vpack.c.bf16 %v425, %v424
        %v477 = vpack.c.bf16 %v441, %v440
        %v478 = vpack.c.bf16 %v457, %v456
        %v479 = vpack.c.bf16 %v427, %v426
        %v480 = vpack.c.bf16 %v443, %v442
        %v481 = vpack.c.bf16 %v459, %v458
        %v482 = vpack.c.bf16 %v429, %v428
        %v483 = vpack.c.bf16 %v445, %v444
        %v484 = vpack.c.bf16 %v461, %v460
        %v485 = vpack.c.bf16 %v431, %v430
        %v486 = vpack.c.bf16 %v447, %v446
        %v487 = vpack.c.bf16 %v463, %v462
        %v488 = vld [vmem:[%s2] sm:$0xf]
        %v489 = vld [vmem:[%s2 + $0x4] sm:$0xf]
        %v490 = vld [vmem:[%s2 + $0x8] sm:$0xf]
        %v491 = vld [vmem:[%s2 + $0xc] sm:$0xf]
        %v492 = vld [vmem:[%s2 + $0x10] sm:$0xf]
        %v493 = vld [vmem:[%s2 + $0x14] sm:$0xf]
        %v494 = vld [vmem:[%s2 + $0x18] sm:$0xf]
        %v495 = vld [vmem:[%s2 + $0x1c] sm:$0xf]
        %v496 = vld [vmem:[%s2 + $0x20] sm:$0xf]
        %v497 = vld [vmem:[%s2 + $0x24] sm:$0xf]
        %v498 = vld [vmem:[%s2 + $0x28] sm:$0xf]
        %v499 = vld [vmem:[%s2 + $0x2c] sm:$0xf]
        %v500 = vld [vmem:[%s2 + $0x30] sm:$0xf]
        %v501 = vld [vmem:[%s2 + $0x34] sm:$0xf]
        %v502 = vld [vmem:[%s2 + $0x38] sm:$0xf]
        %v503 = vld [vmem:[%s2 + $0x3c] sm:$0xf]
        %v504 = vld [vmem:[%s2 + $0x40] sm:$0xf]
        %v505 = vld [vmem:[%s2 + $0x44] sm:$0xf]
        %v506 = vld [vmem:[%s2 + $0x48] sm:$0xf]
        %v507 = vld [vmem:[%s2 + $0x4c] sm:$0xf]
        %v508 = vld [vmem:[%s2 + $0x50] sm:$0xf]
        %v509 = vld [vmem:[%s2 + $0x54] sm:$0xf]
        %v510 = vld [vmem:[%s2 + $0x58] sm:$0xf]
        %v511 = vld [vmem:[%s2 + $0x5c] sm:$0xf]
        %v512 = vld [vmem:[%s2 + $0x60] sm:$0xf]
        %v513 = vld [vmem:[%s2 + $0x64] sm:$0xf]
        %v514 = vld [vmem:[%s2 + $0x68] sm:$0xf]
        %v515 = vld [vmem:[%s2 + $0x6c] sm:$0xf]
        %v516 = vld [vmem:[%s2 + $0x70] sm:$0xf]
        %v517 = vld [vmem:[%s2 + $0x74] sm:$0xf]
        %v518 = vld [vmem:[%s2 + $0x78] sm:$0xf]
        %v519 = vld [vmem:[%s2 + $0x7c] sm:$0xf]
        %v520 = vld [vmem:[%s2 + $0x80] sm:$0xf]
        %v521 = vld [vmem:[%s2 + $0x84] sm:$0xf]
        %v522 = vld [vmem:[%s2 + $0x88] sm:$0xf]
        %v523 = vld [vmem:[%s2 + $0x8c] sm:$0xf]
        %v524 = vld [vmem:[%s2 + $0x90] sm:$0xf]
        %v525 = vld [vmem:[%s2 + $0x94] sm:$0xf]
        %v526 = vld [vmem:[%s2 + $0x98] sm:$0xf]
        %v527 = vld [vmem:[%s2 + $0x9c] sm:$0xf]
        %v528 = vld [vmem:[%s2 + $0xa0] sm:$0xf]
        %v529 = vld [vmem:[%s2 + $0xa4] sm:$0xf]
        %v530 = vld [vmem:[%s2 + $0xa8] sm:$0xf]
        %v531 = vld [vmem:[%s2 + $0xac] sm:$0xf]
        %v532 = vld [vmem:[%s2 + $0xb0] sm:$0xf]
        %v533 = vld [vmem:[%s2 + $0xb4] sm:$0xf]
        %v534 = vld [vmem:[%s2 + $0xb8] sm:$0xf]
        %v535 = vld [vmem:[%s2 + $0xbc] sm:$0xf]
        %v584 = vunpack.c.l.b16 %v488
        %v585 = vunpack.c.l.b16 %v489
        %v586 = vunpack.c.l.b16 %v490
        %v587 = vunpack.c.l.b16 %v491
        %v588 = vunpack.c.l.b16 %v492
        %v589 = vunpack.c.l.b16 %v493
        %v590 = vunpack.c.l.b16 %v494
        %v591 = vunpack.c.l.b16 %v495
        %v592 = vunpack.c.l.b16 %v496
        %v593 = vunpack.c.l.b16 %v497
        %v594 = vunpack.c.l.b16 %v498
        %v595 = vunpack.c.l.b16 %v499
        %v596 = vunpack.c.l.b16 %v500
        %v597 = vunpack.c.l.b16 %v501
        %v598 = vunpack.c.l.b16 %v502
        %v599 = vunpack.c.l.b16 %v503
        %v600 = vunpack.c.l.b16 %v504
        %v601 = vunpack.c.l.b16 %v505
        %v602 = vunpack.c.l.b16 %v506
        %v603 = vunpack.c.l.b16 %v507
        %v604 = vunpack.c.l.b16 %v508
        %v605 = vunpack.c.l.b16 %v509
        %v606 = vunpack.c.l.b16 %v510
        %v607 = vunpack.c.l.b16 %v511
        %v608 = vunpack.c.l.b16 %v512
        %v609 = vunpack.c.l.b16 %v513
        %v610 = vunpack.c.l.b16 %v514
        %v611 = vunpack.c.l.b16 %v515
        %v612 = vunpack.c.l.b16 %v516
        %v613 = vunpack.c.l.b16 %v517
        %v614 = vunpack.c.l.b16 %v518
        %v615 = vunpack.c.l.b16 %v519
        %v616 = vunpack.c.l.b16 %v520
        %v617 = vunpack.c.l.b16 %v521
        %v618 = vunpack.c.l.b16 %v522
        %v619 = vunpack.c.l.b16 %v523
        %v620 = vunpack.c.l.b16 %v524
        %v621 = vunpack.c.l.b16 %v525
        %v622 = vunpack.c.l.b16 %v526
        %v623 = vunpack.c.l.b16 %v527
        %v624 = vunpack.c.l.b16 %v528
        %v625 = vunpack.c.l.b16 %v529
        %v626 = vunpack.c.l.b16 %v530
        %v627 = vunpack.c.l.b16 %v531
        %v628 = vunpack.c.l.b16 %v532
        %v629 = vunpack.c.l.b16 %v533
        %v630 = vunpack.c.l.b16 %v534
        %v631 = vunpack.c.l.b16 %v535
        %v632 = vpack.c.b16 %v585, %v584
        %v633 = vpack.c.b16 %v587, %v586
        %v634 = vpack.c.b16 %v589, %v588
        %v635 = vpack.c.b16 %v591, %v590
        %v636 = vpack.c.b16 %v593, %v592
        %v637 = vpack.c.b16 %v595, %v594
        %v638 = vpack.c.b16 %v597, %v596
        %v639 = vpack.c.b16 %v599, %v598
        %v640 = vpack.c.b16 %v601, %v600
        %v641 = vpack.c.b16 %v603, %v602
        %v642 = vpack.c.b16 %v605, %v604
        %v643 = vpack.c.b16 %v607, %v606
        %v644 = vpack.c.b16 %v609, %v608
        %v645 = vpack.c.b16 %v611, %v610
        %v646 = vpack.c.b16 %v613, %v612
        %v647 = vpack.c.b16 %v615, %v614
        %v648 = vpack.c.b16 %v617, %v616
        %v649 = vpack.c.b16 %v619, %v618
        %v650 = vpack.c.b16 %v621, %v620
        %v651 = vpack.c.b16 %v623, %v622
        %v652 = vpack.c.b16 %v625, %v624
        %v653 = vpack.c.b16 %v627, %v626
        %v654 = vpack.c.b16 %v629, %v628
        %v655 = vpack.c.b16 %v631, %v630
        %680 = vmatpush.bf16.msra.mxu0 %v639
        %681 = vmatpush.bf16.msra.mxu0 %v638
        %682 = vmatpush.bf16.msra.mxu0 %v637
        %683 = vmatpush.bf16.msra.mxu0 %v636
        %684 = vmatpush.bf16.msra.mxu0 %v635
        %685 = vmatpush.bf16.msra.mxu0 %v634
        %686 = vmatpush.bf16.msra.mxu0 %v633
        %687 = vmatpush.bf16.msra.mxu0 %v632
        %688 = vmatmul.bf16.gmra.mxu0 %v464
        %v689 = vpop.f32.mrf.mxu0
        %v690 = vadd.f32 0.0, %v689
        %v691 = vpop.f32.mrf.mxu0
        %v692 = vadd.f32 0.0, %v691
        %693 = vmatmul.bf16.gmra.mxu0 %v467
        %v694 = vpop.f32.mrf.mxu0
        %v695 = vadd.f32 0.0, %v694
        %v696 = vpop.f32.mrf.mxu0
        %v697 = vadd.f32 0.0, %v696
        %698 = vmatmul.bf16.gmra.mxu0 %v470
        %v699 = vpop.f32.mrf.mxu0
        %v700 = vadd.f32 0.0, %v699
        %v701 = vpop.f32.mrf.mxu0
        %v702 = vadd.f32 0.0, %v701
        %703 = vmatmul.bf16.gmra.mxu0 %v473
        %v704 = vpop.f32.mrf.mxu0
        %v705 = vadd.f32 0.0, %v704
        %v706 = vpop.f32.mrf.mxu0
        %v707 = vadd.f32 0.0, %v706
        %708 = vmatmul.bf16.gmra.mxu0 %v476
        %v709 = vpop.f32.mrf.mxu0
        %v710 = vadd.f32 0.0, %v709
        %v711 = vpop.f32.mrf.mxu0
        %v712 = vadd.f32 0.0, %v711
        %713 = vmatmul.bf16.gmra.mxu0 %v479
        %v714 = vpop.f32.mrf.mxu0
        %v715 = vadd.f32 0.0, %v714
        %v716 = vpop.f32.mrf.mxu0
        %v717 = vadd.f32 0.0, %v716
        %718 = vmatmul.bf16.gmra.mxu0 %v482
        %v719 = vpop.f32.mrf.mxu0
        %v720 = vadd.f32 0.0, %v719
        %v721 = vpop.f32.mrf.mxu0
        %v722 = vadd.f32 0.0, %v721
        %723 = vmatmul.bf16.gmra.mxu0 %v485
        %v724 = vpop.f32.mrf.mxu0
        %v725 = vadd.f32 0.0, %v724
        %v726 = vpop.f32.mrf.mxu0
        %v727 = vadd.f32 0.0, %v726
        %728 = vdwg.mxu0
        %729 = vmatpush.bf16.msra.mxu0 %v647
        %730 = vmatpush.bf16.msra.mxu0 %v646
        %731 = vmatpush.bf16.msra.mxu0 %v645
        %732 = vmatpush.bf16.msra.mxu0 %v644
        %733 = vmatpush.bf16.msra.mxu0 %v643
        %734 = vmatpush.bf16.msra.mxu0 %v642
        %735 = vmatpush.bf16.msra.mxu0 %v641
        %736 = vmatpush.bf16.msra.mxu0 %v640
        %737 = vmatmul.bf16.gmra.mxu0 %v465
        %v738 = vpop.f32.mrf.mxu0
        %v739 = vadd.f32 %v690, %v738
        %v740 = vpop.f32.mrf.mxu0
        %v741 = vadd.f32 %v692, %v740
        %742 = vmatmul.bf16.gmra.mxu0 %v468
        %v743 = vpop.f32.mrf.mxu0
        %v744 = vadd.f32 %v695, %v743
        %v745 = vpop.f32.mrf.mxu0
        %v746 = vadd.f32 %v697, %v745
        %747 = vmatmul.bf16.gmra.mxu0 %v471
        %v748 = vpop.f32.mrf.mxu0
        %v749 = vadd.f32 %v700, %v748
        %v750 = vpop.f32.mrf.mxu0
        %v751 = vadd.f32 %v702, %v750
        %752 = vmatmul.bf16.gmra.mxu0 %v474
        %v753 = vpop.f32.mrf.mxu0
        %v754 = vadd.f32 %v705, %v753
        %v755 = vpop.f32.mrf.mxu0
        %v756 = vadd.f32 %v707, %v755
        %757 = vmatmul.bf16.gmra.mxu0 %v477
        %v758 = vpop.f32.mrf.mxu0
        %v759 = vadd.f32 %v710, %v758
        %v760 = vpop.f32.mrf.mxu0
        %v761 = vadd.f32 %v712, %v760
        %762 = vmatmul.bf16.gmra.mxu0 %v480
        %v763 = vpop.f32.mrf.mxu0
        %v764 = vadd.f32 %v715, %v763
        %v765 = vpop.f32.mrf.mxu0
        %v766 = vadd.f32 %v717, %v765
        %767 = vmatmul.bf16.gmra.mxu0 %v483
        %v768 = vpop.f32.mrf.mxu0
        %v769 = vadd.f32 %v720, %v768
        %v770 = vpop.f32.mrf.mxu0
        %v771 = vadd.f32 %v722, %v770
        %772 = vmatmul.bf16.gmra.mxu0 %v486
        %v773 = vpop.f32.mrf.mxu0
        %v774 = vadd.f32 %v725, %v773
        %v775 = vpop.f32.mrf.mxu0
        %v776 = vadd.f32 %v727, %v775
        %777 = vdwg.mxu0
        %778 = vmatpush.bf16.msra.mxu0 %v655
        %779 = vmatpush.bf16.msra.mxu0 %v654
        %780 = vmatpush.bf16.msra.mxu0 %v653
        %781 = vmatpush.bf16.msra.mxu0 %v652
        %782 = vmatpush.bf16.msra.mxu0 %v651
        %783 = vmatpush.bf16.msra.mxu0 %v650
        %784 = vmatpush.bf16.msra.mxu0 %v649
        %785 = vmatpush.bf16.msra.mxu0 %v648
        %786 = vmatmul.bf16.gmra.mxu0 %v466
        %v787 = vpop.f32.mrf.mxu0
        %v788 = vadd.f32 %v739, %v787
        %v789 = vpop.f32.mrf.mxu0
        %v790 = vadd.f32 %v741, %v789
        %791 = vmatmul.bf16.gmra.mxu0 %v469
        %v792 = vpop.f32.mrf.mxu0
        %v793 = vadd.f32 %v744, %v792
        %v794 = vpop.f32.mrf.mxu0
        %v795 = vadd.f32 %v746, %v794
        %796 = vmatmul.bf16.gmra.mxu0 %v472
        %v797 = vpop.f32.mrf.mxu0
        %v798 = vadd.f32 %v749, %v797
        %v799 = vpop.f32.mrf.mxu0
        %v800 = vadd.f32 %v751, %v799
        %801 = vmatmul.bf16.gmra.mxu0 %v475
        %v802 = vpop.f32.mrf.mxu0
        %v803 = vadd.f32 %v754, %v802
        %v804 = vpop.f32.mrf.mxu0
        %v805 = vadd.f32 %v756, %v804
        %806 = vmatmul.bf16.gmra.mxu0 %v478
        %v807 = vpop.f32.mrf.mxu0
        %v808 = vadd.f32 %v759, %v807
        %v809 = vpop.f32.mrf.mxu0
        %v810 = vadd.f32 %v761, %v809
        %811 = vmatmul.bf16.gmra.mxu0 %v481
        %v812 = vpop.f32.mrf.mxu0
        %v813 = vadd.f32 %v764, %v812
        %v814 = vpop.f32.mrf.mxu0
        %v815 = vadd.f32 %v766, %v814
        %816 = vmatmul.bf16.gmra.mxu0 %v484
        %v817 = vpop.f32.mrf.mxu0
        %v818 = vadd.f32 %v769, %v817
        %v819 = vpop.f32.mrf.mxu0
        %v820 = vadd.f32 %v771, %v819
        %821 = vmatmul.bf16.gmra.mxu0 %v487
        %v822 = vpop.f32.mrf.mxu0
        %v823 = vadd.f32 %v774, %v822
        %v824 = vpop.f32.mrf.mxu0
        %v825 = vadd.f32 %v776, %v824
        %826 = vdwg.mxu0
        %827 = vst [vmem:[#allocation3] sm:$0xff] %v788
        %828 = vst [vmem:[#allocation3 + $0x8] sm:$0xff] %v790
        %829 = vst [vmem:[#allocation3 + $0x10] sm:$0xff] %v793
        %830 = vst [vmem:[#allocation3 + $0x18] sm:$0xff] %v795
        %831 = vst [vmem:[#allocation3 + $0x20] sm:$0xff] %v798
        %832 = vst [vmem:[#allocation3 + $0x28] sm:$0xff] %v800
        %833 = vst [vmem:[#allocation3 + $0x30] sm:$0xff] %v803
        %834 = vst [vmem:[#allocation3 + $0x38] sm:$0xff] %v805
        %835 = vst [vmem:[#allocation3 + $0x40] sm:$0xff] %v808
        %836 = vst [vmem:[#allocation3 + $0x48] sm:$0xff] %v810
        %837 = vst [vmem:[#allocation3 + $0x50] sm:$0xff] %v813
        %838 = vst [vmem:[#allocation3 + $0x58] sm:$0xff] %v815
        %839 = vst [vmem:[#allocation3 + $0x60] sm:$0xff] %v818
        %840 = vst [vmem:[#allocation3 + $0x68] sm:$0xff] %v820
        %841 = vst [vmem:[#allocation3 + $0x70] sm:$0xff] %v823
        %842 = vst [vmem:[#allocation3 + $0x78] sm:$0xff] %v825
        %v843 = vld [vmem:[#allocation2 + $0x17] sm:$0xff]
        %v844 = vld [vmem:[#allocation2 + $0x1f] sm:$0xff]
        %v845 = vld [vmem:[#allocation2 + $0x27] sm:$0xff]
        %v846 = vld [vmem:[#allocation2 + $0x2f] sm:$0xff]
        %v847 = vld [vmem:[#allocation2 + $0x37] sm:$0xff]
        %v848 = vld [vmem:[#allocation2 + $0x3f] sm:$0xff]
        %v849 = vld [vmem:[#allocation2 + $0x47] sm:$0xff]
        %v850 = vld [vmem:[#allocation2 + $0x4f] sm:$0xff]
        %v851 = vld [vmem:[#allocation2 + $0x57] sm:$0xff]
        %v852 = vld [vmem:[#allocation2 + $0x5f] sm:$0xff]
        %v853 = vld [vmem:[#allocation2 + $0x67] sm:$0xff]
        %v854 = vld [vmem:[#allocation2 + $0x6f] sm:$0xff]
        %v855 = vld [vmem:[#allocation2 + $0x77] sm:$0xff]
        %v856 = vld [vmem:[#allocation2 + $0x7f] sm:$0xff]
        %v857 = vld [vmem:[#allocation2 + $0x87] sm:$0xff]
        %v858 = vld [vmem:[#allocation2 + $0x8f] sm:$0xff]
        %v859 = vld [vmem:[#allocation2 + $0x18] sm:$0xff]
        %v860 = vld [vmem:[#allocation2 + $0x20] sm:$0xff]
        %v861 = vld [vmem:[#allocation2 + $0x28] sm:$0xff]
        %v862 = vld [vmem:[#allocation2 + $0x30] sm:$0xff]
        %v863 = vld [vmem:[#allocation2 + $0x38] sm:$0xff]
        %v864 = vld [vmem:[#allocation2 + $0x40] sm:$0xff]
        %v865 = vld [vmem:[#allocation2 + $0x48] sm:$0xff]
        %v866 = vld [vmem:[#allocation2 + $0x50] sm:$0xff]
        %v867 = vld [vmem:[#allocation2 + $0x58] sm:$0xff]
        %v868 = vld [vmem:[#allocation2 + $0x60] sm:$0xff]
        %v869 = vld [vmem:[#allocation2 + $0x68] sm:$0xff]
        %v870 = vld [vmem:[#allocation2 + $0x70] sm:$0xff]
        %v871 = vld [vmem:[#allocation2 + $0x78] sm:$0xff]
        %v872 = vld [vmem:[#allocation2 + $0x80] sm:$0xff]
        %v873 = vld [vmem:[#allocation2 + $0x88] sm:$0xff]
        %v874 = vld [vmem:[#allocation2 + $0x90] sm:$0xff]
        %v875 = vld [vmem:[#allocation2 + $0x19] sm:$0xff]
        %v876 = vld [vmem:[#allocation2 + $0x21] sm:$0xff]
        %v877 = vld [vmem:[#allocation2 + $0x29] sm:$0xff]
        %v878 = vld [vmem:[#allocation2 + $0x31] sm:$0xff]
        %v879 = vld [vmem:[#allocation2 + $0x39] sm:$0xff]
        %v880 = vld [vmem:[#allocation2 + $0x41] sm:$0xff]
        %v881 = vld [vmem:[#allocation2 + $0x49] sm:$0xff]
        %v882 = vld [vmem:[#allocation2 + $0x51] sm:$0xff]
        %v883 = vld [vmem:[#allocation2 + $0x59] sm:$0xff]
        %v884 = vld [vmem:[#allocation2 + $0x61] sm:$0xff]
        %v885 = vld [vmem:[#allocation2 + $0x69] sm:$0xff]
        %v886 = vld [vmem:[#allocation2 + $0x71] sm:$0xff]
        %v887 = vld [vmem:[#allocation2 + $0x79] sm:$0xff]
        %v888 = vld [vmem:[#allocation2 + $0x81] sm:$0xff]
        %v889 = vld [vmem:[#allocation2 + $0x89] sm:$0xff]
        %v890 = vld [vmem:[#allocation2 + $0x91] sm:$0xff]
        %v891 = vpack.c.bf16 %v844, %v843
        %v892 = vpack.c.bf16 %v860, %v859
        %v893 = vpack.c.bf16 %v876, %v875
        %v894 = vpack.c.bf16 %v846, %v845
        %v895 = vpack.c.bf16 %v862, %v861
        %v896 = vpack.c.bf16 %v878, %v877
        %v897 = vpack.c.bf16 %v848, %v847
        %v898 = vpack.c.bf16 %v864, %v863
        %v899 = vpack.c.bf16 %v880, %v879
        %v900 = vpack.c.bf16 %v850, %v849
        %v901 = vpack.c.bf16 %v866, %v865
        %v902 = vpack.c.bf16 %v882, %v881
        %v903 = vpack.c.bf16 %v852, %v851
        %v904 = vpack.c.bf16 %v868, %v867
        %v905 = vpack.c.bf16 %v884, %v883
        %v906 = vpack.c.bf16 %v854, %v853
        %v907 = vpack.c.bf16 %v870, %v869
        %v908 = vpack.c.bf16 %v886, %v885
        %v909 = vpack.c.bf16 %v856, %v855
        %v910 = vpack.c.bf16 %v872, %v871
        %v911 = vpack.c.bf16 %v888, %v887
        %v912 = vpack.c.bf16 %v858, %v857
        %v913 = vpack.c.bf16 %v874, %v873
        %v914 = vpack.c.bf16 %v890, %v889
        %s915 = scalar_lea.vmem %s2, 192
        %v916 = vld [vmem:[%s915] sm:$0xf]
        %v917 = vld [vmem:[%s915 + $0x4] sm:$0xf]
        %v918 = vld [vmem:[%s915 + $0x8] sm:$0xf]
        %v919 = vld [vmem:[%s915 + $0xc] sm:$0xf]
        %v920 = vld [vmem:[%s915 + $0x10] sm:$0xf]
        %v921 = vld [vmem:[%s915 + $0x14] sm:$0xf]
        %v922 = vld [vmem:[%s915 + $0x18] sm:$0xf]
        %v923 = vld [vmem:[%s915 + $0x1c] sm:$0xf]
        %v924 = vld [vmem:[%s915 + $0x20] sm:$0xf]
        %v925 = vld [vmem:[%s915 + $0x24] sm:$0xf]
        %v926 = vld [vmem:[%s915 + $0x28] sm:$0xf]
        %v927 = vld [vmem:[%s915 + $0x2c] sm:$0xf]
        %v928 = vld [vmem:[%s915 + $0x30] sm:$0xf]
        %v929 = vld [vmem:[%s915 + $0x34] sm:$0xf]
        %v930 = vld [vmem:[%s915 + $0x38] sm:$0xf]
        %v931 = vld [vmem:[%s915 + $0x3c] sm:$0xf]
        %v932 = vld [vmem:[%s915 + $0x40] sm:$0xf]
        %v933 = vld [vmem:[%s915 + $0x44] sm:$0xf]
        %v934 = vld [vmem:[%s915 + $0x48] sm:$0xf]
        %v935 = vld [vmem:[%s915 + $0x4c] sm:$0xf]
        %v936 = vld [vmem:[%s915 + $0x50] sm:$0xf]
        %v937 = vld [vmem:[%s915 + $0x54] sm:$0xf]
        %v938 = vld [vmem:[%s915 + $0x58] sm:$0xf]
        %v939 = vld [vmem:[%s915 + $0x5c] sm:$0xf]
        %v940 = vld [vmem:[%s915 + $0x60] sm:$0xf]
        %v941 = vld [vmem:[%s915 + $0x64] sm:$0xf]
        %v942 = vld [vmem:[%s915 + $0x68] sm:$0xf]
        %v943 = vld [vmem:[%s915 + $0x6c] sm:$0xf]
        %v944 = vld [vmem:[%s915 + $0x70] sm:$0xf]
        %v945 = vld [vmem:[%s915 + $0x74] sm:$0xf]
        %v946 = vld [vmem:[%s915 + $0x78] sm:$0xf]
        %v947 = vld [vmem:[%s915 + $0x7c] sm:$0xf]
        %v948 = vld [vmem:[%s915 + $0x80] sm:$0xf]
        %v949 = vld [vmem:[%s915 + $0x84] sm:$0xf]
        %v950 = vld [vmem:[%s915 + $0x88] sm:$0xf]
        %v951 = vld [vmem:[%s915 + $0x8c] sm:$0xf]
        %v952 = vld [vmem:[%s915 + $0x90] sm:$0xf]
        %v953 = vld [vmem:[%s915 + $0x94] sm:$0xf]
        %v954 = vld [vmem:[%s915 + $0x98] sm:$0xf]
        %v955 = vld [vmem:[%s915 + $0x9c] sm:$0xf]
        %v956 = vld [vmem:[%s915 + $0xa0] sm:$0xf]
        %v957 = vld [vmem:[%s915 + $0xa4] sm:$0xf]
        %v958 = vld [vmem:[%s915 + $0xa8] sm:$0xf]
        %v959 = vld [vmem:[%s915 + $0xac] sm:$0xf]
        %v960 = vld [vmem:[%s915 + $0xb0] sm:$0xf]
        %v961 = vld [vmem:[%s915 + $0xb4] sm:$0xf]
        %v962 = vld [vmem:[%s915 + $0xb8] sm:$0xf]
        %v963 = vld [vmem:[%s915 + $0xbc] sm:$0xf]
        %v1012 = vunpack.c.l.b16 %v916
        %v1013 = vunpack.c.l.b16 %v917
        %v1014 = vunpack.c.l.b16 %v918
        %v1015 = vunpack.c.l.b16 %v919
        %v1016 = vunpack.c.l.b16 %v920
        %v1017 = vunpack.c.l.b16 %v921
        %v1018 = vunpack.c.l.b16 %v922
        %v1019 = vunpack.c.l.b16 %v923
        %v1020 = vunpack.c.l.b16 %v924
        %v1021 = vunpack.c.l.b16 %v925
        %v1022 = vunpack.c.l.b16 %v926
        %v1023 = vunpack.c.l.b16 %v927
        %v1024 = vunpack.c.l.b16 %v928
        %v1025 = vunpack.c.l.b16 %v929
        %v1026 = vunpack.c.l.b16 %v930
        %v1027 = vunpack.c.l.b16 %v931
        %v1028 = vunpack.c.l.b16 %v932
        %v1029 = vunpack.c.l.b16 %v933
        %v1030 = vunpack.c.l.b16 %v934
        %v1031 = vunpack.c.l.b16 %v935
        %v1032 = vunpack.c.l.b16 %v936
        %v1033 = vunpack.c.l.b16 %v937
        %v1034 = vunpack.c.l.b16 %v938
        %v1035 = vunpack.c.l.b16 %v939
        %v1036 = vunpack.c.l.b16 %v940
        %v1037 = vunpack.c.l.b16 %v941
        %v1038 = vunpack.c.l.b16 %v942
        %v1039 = vunpack.c.l.b16 %v943
        %v1040 = vunpack.c.l.b16 %v944
        %v1041 = vunpack.c.l.b16 %v945
        %v1042 = vunpack.c.l.b16 %v946
        %v1043 = vunpack.c.l.b16 %v947
        %v1044 = vunpack.c.l.b16 %v948
        %v1045 = vunpack.c.l.b16 %v949
        %v1046 = vunpack.c.l.b16 %v950
        %v1047 = vunpack.c.l.b16 %v951
        %v1048 = vunpack.c.l.b16 %v952
        %v1049 = vunpack.c.l.b16 %v953
        %v1050 = vunpack.c.l.b16 %v954
        %v1051 = vunpack.c.l.b16 %v955
        %v1052 = vunpack.c.l.b16 %v956
        %v1053 = vunpack.c.l.b16 %v957
        %v1054 = vunpack.c.l.b16 %v958
        %v1055 = vunpack.c.l.b16 %v959
        %v1056 = vunpack.c.l.b16 %v960
        %v1057 = vunpack.c.l.b16 %v961
        %v1058 = vunpack.c.l.b16 %v962
        %v1059 = vunpack.c.l.b16 %v963
        %v1060 = vpack.c.b16 %v1013, %v1012
        %v1061 = vpack.c.b16 %v1015, %v1014
        %v1062 = vpack.c.b16 %v1017, %v1016
        %v1063 = vpack.c.b16 %v1019, %v1018
        %v1064 = vpack.c.b16 %v1021, %v1020
        %v1065 = vpack.c.b16 %v1023, %v1022
        %v1066 = vpack.c.b16 %v1025, %v1024
        %v1067 = vpack.c.b16 %v1027, %v1026
        %v1068 = vpack.c.b16 %v1029, %v1028
        %v1069 = vpack.c.b16 %v1031, %v1030
        %v1070 = vpack.c.b16 %v1033, %v1032
        %v1071 = vpack.c.b16 %v1035, %v1034
        %v1072 = vpack.c.b16 %v1037, %v1036
        %v1073 = vpack.c.b16 %v1039, %v1038
        %v1074 = vpack.c.b16 %v1041, %v1040
        %v1075 = vpack.c.b16 %v1043, %v1042
        %v1076 = vpack.c.b16 %v1045, %v1044
        %v1077 = vpack.c.b16 %v1047, %v1046
        %v1078 = vpack.c.b16 %v1049, %v1048
        %v1079 = vpack.c.b16 %v1051, %v1050
        %v1080 = vpack.c.b16 %v1053, %v1052
        %v1081 = vpack.c.b16 %v1055, %v1054
        %v1082 = vpack.c.b16 %v1057, %v1056
        %v1083 = vpack.c.b16 %v1059, %v1058
        %1108 = vmatpush.bf16.msra.mxu0 %v1067
        %1109 = vmatpush.bf16.msra.mxu0 %v1066
        %1110 = vmatpush.bf16.msra.mxu0 %v1065
        %1111 = vmatpush.bf16.msra.mxu0 %v1064
        %1112 = vmatpush.bf16.msra.mxu0 %v1063
        %1113 = vmatpush.bf16.msra.mxu0 %v1062
        %1114 = vmatpush.bf16.msra.mxu0 %v1061
        %1115 = vmatpush.bf16.msra.mxu0 %v1060
        %1116 = vmatmul.bf16.gmra.mxu0 %v891
        %v1117 = vpop.f32.mrf.mxu0
        %v1118 = vadd.f32 0.0, %v1117
        %v1119 = vpop.f32.mrf.mxu0
        %v1120 = vadd.f32 0.0, %v1119
        %1121 = vmatmul.bf16.gmra.mxu0 %v894
        %v1122 = vpop.f32.mrf.mxu0
        %v1123 = vadd.f32 0.0, %v1122
        %v1124 = vpop.f32.mrf.mxu0
        %v1125 = vadd.f32 0.0, %v1124
        %1126 = vmatmul.bf16.gmra.mxu0 %v897
        %v1127 = vpop.f32.mrf.mxu0
        %v1128 = vadd.f32 0.0, %v1127
        %v1129 = vpop.f32.mrf.mxu0
        %v1130 = vadd.f32 0.0, %v1129
        %1131 = vmatmul.bf16.gmra.mxu0 %v900
        %v1132 = vpop.f32.mrf.mxu0
        %v1133 = vadd.f32 0.0, %v1132
        %v1134 = vpop.f32.mrf.mxu0
        %v1135 = vadd.f32 0.0, %v1134
        %1136 = vmatmul.bf16.gmra.mxu0 %v903
        %v1137 = vpop.f32.mrf.mxu0
        %v1138 = vadd.f32 0.0, %v1137
        %v1139 = vpop.f32.mrf.mxu0
        %v1140 = vadd.f32 0.0, %v1139
        %1141 = vmatmul.bf16.gmra.mxu0 %v906
        %v1142 = vpop.f32.mrf.mxu0
        %v1143 = vadd.f32 0.0, %v1142
        %v1144 = vpop.f32.mrf.mxu0
        %v1145 = vadd.f32 0.0, %v1144
        %1146 = vmatmul.bf16.gmra.mxu0 %v909
        %v1147 = vpop.f32.mrf.mxu0
        %v1148 = vadd.f32 0.0, %v1147
        %v1149 = vpop.f32.mrf.mxu0
        %v1150 = vadd.f32 0.0, %v1149
        %1151 = vmatmul.bf16.gmra.mxu0 %v912
        %v1152 = vpop.f32.mrf.mxu0
        %v1153 = vadd.f32 0.0, %v1152
        %v1154 = vpop.f32.mrf.mxu0
        %v1155 = vadd.f32 0.0, %v1154
        %1156 = vdwg.mxu0
        %1157 = vmatpush.bf16.msra.mxu0 %v1075
        %1158 = vmatpush.bf16.msra.mxu0 %v1074
        %1159 = vmatpush.bf16.msra.mxu0 %v1073
        %1160 = vmatpush.bf16.msra.mxu0 %v1072
        %1161 = vmatpush.bf16.msra.mxu0 %v1071
        %1162 = vmatpush.bf16.msra.mxu0 %v1070
        %1163 = vmatpush.bf16.msra.mxu0 %v1069
        %1164 = vmatpush.bf16.msra.mxu0 %v1068
        %1165 = vmatmul.bf16.gmra.mxu0 %v892
        %v1166 = vpop.f32.mrf.mxu0
        %v1167 = vadd.f32 %v1118, %v1166
        %v1168 = vpop.f32.mrf.mxu0
        %v1169 = vadd.f32 %v1120, %v1168
        %1170 = vmatmul.bf16.gmra.mxu0 %v895
        %v1171 = vpop.f32.mrf.mxu0
        %v1172 = vadd.f32 %v1123, %v1171
        %v1173 = vpop.f32.mrf.mxu0
        %v1174 = vadd.f32 %v1125, %v1173
        %1175 = vmatmul.bf16.gmra.mxu0 %v898
        %v1176 = vpop.f32.mrf.mxu0
        %v1177 = vadd.f32 %v1128, %v1176
        %v1178 = vpop.f32.mrf.mxu0
        %v1179 = vadd.f32 %v1130, %v1178
        %1180 = vmatmul.bf16.gmra.mxu0 %v901
        %v1181 = vpop.f32.mrf.mxu0
        %v1182 = vadd.f32 %v1133, %v1181
        %v1183 = vpop.f32.mrf.mxu0
        %v1184 = vadd.f32 %v1135, %v1183
        %1185 = vmatmul.bf16.gmra.mxu0 %v904
        %v1186 = vpop.f32.mrf.mxu0
        %v1187 = vadd.f32 %v1138, %v1186
        %v1188 = vpop.f32.mrf.mxu0
        %v1189 = vadd.f32 %v1140, %v1188
        %1190 = vmatmul.bf16.gmra.mxu0 %v907
        %v1191 = vpop.f32.mrf.mxu0
        %v1192 = vadd.f32 %v1143, %v1191
        %v1193 = vpop.f32.mrf.mxu0
        %v1194 = vadd.f32 %v1145, %v1193
        %1195 = vmatmul.bf16.gmra.mxu0 %v910
        %v1196 = vpop.f32.mrf.mxu0
        %v1197 = vadd.f32 %v1148, %v1196
        %v1198 = vpop.f32.mrf.mxu0
        %v1199 = vadd.f32 %v1150, %v1198
        %1200 = vmatmul.bf16.gmra.mxu0 %v913
        %v1201 = vpop.f32.mrf.mxu0
        %v1202 = vadd.f32 %v1153, %v1201
        %v1203 = vpop.f32.mrf.mxu0
        %v1204 = vadd.f32 %v1155, %v1203
        %1205 = vdwg.mxu0
        %1206 = vmatpush.bf16.msra.mxu0 %v1083
        %1207 = vmatpush.bf16.msra.mxu0 %v1082
        %1208 = vmatpush.bf16.msra.mxu0 %v1081
        %1209 = vmatpush.bf16.msra.mxu0 %v1080
        %1210 = vmatpush.bf16.msra.mxu0 %v1079
        %1211 = vmatpush.bf16.msra.mxu0 %v1078
        %1212 = vmatpush.bf16.msra.mxu0 %v1077
        %1213 = vmatpush.bf16.msra.mxu0 %v1076
        %1214 = vmatmul.bf16.gmra.mxu0 %v893
        %v1215 = vpop.f32.mrf.mxu0
        %v1216 = vadd.f32 %v1167, %v1215
        %v1217 = vpop.f32.mrf.mxu0
        %v1218 = vadd.f32 %v1169, %v1217
        %1219 = vmatmul.bf16.gmra.mxu0 %v896
        %v1220 = vpop.f32.mrf.mxu0
        %v1221 = vadd.f32 %v1172, %v1220
        %v1222 = vpop.f32.mrf.mxu0
        %v1223 = vadd.f32 %v1174, %v1222
        %1224 = vmatmul.bf16.gmra.mxu0 %v899
        %v1225 = vpop.f32.mrf.mxu0
        %v1226 = vadd.f32 %v1177, %v1225
        %v1227 = vpop.f32.mrf.mxu0
        %v1228 = vadd.f32 %v1179, %v1227
        %1229 = vmatmul.bf16.gmra.mxu0 %v902
        %v1230 = vpop.f32.mrf.mxu0
        %v1231 = vadd.f32 %v1182, %v1230
        %v1232 = vpop.f32.mrf.mxu0
        %v1233 = vadd.f32 %v1184, %v1232
        %1234 = vmatmul.bf16.gmra.mxu0 %v905
        %v1235 = vpop.f32.mrf.mxu0
        %v1236 = vadd.f32 %v1187, %v1235
        %v1237 = vpop.f32.mrf.mxu0
        %v1238 = vadd.f32 %v1189, %v1237
        %1239 = vmatmul.bf16.gmra.mxu0 %v908
        %v1240 = vpop.f32.mrf.mxu0
        %v1241 = vadd.f32 %v1192, %v1240
        %v1242 = vpop.f32.mrf.mxu0
        %v1243 = vadd.f32 %v1194, %v1242
        %1244 = vmatmul.bf16.gmra.mxu0 %v911
        %v1245 = vpop.f32.mrf.mxu0
        %v1246 = vadd.f32 %v1197, %v1245
        %v1247 = vpop.f32.mrf.mxu0
        %v1248 = vadd.f32 %v1199, %v1247
        %1249 = vmatmul.bf16.gmra.mxu0 %v914
        %v1250 = vpop.f32.mrf.mxu0
        %v1251 = vadd.f32 %v1202, %v1250
        %v1252 = vpop.f32.mrf.mxu0
        %v1253 = vadd.f32 %v1204, %v1252
        %1254 = vdwg.mxu0
        %v1255 = vld [vmem:[#allocation3] sm:$0xff]
        %v1256 = vld [vmem:[#allocation3 + $0x8] sm:$0xff]
        %v1257 = vld [vmem:[#allocation3 + $0x10] sm:$0xff]
        %v1258 = vld [vmem:[#allocation3 + $0x18] sm:$0xff]
        %v1259 = vld [vmem:[#allocation3 + $0x20] sm:$0xff]
        %v1260 = vld [vmem:[#allocation3 + $0x28] sm:$0xff]
        %v1261 = vld [vmem:[#allocation3 + $0x30] sm:$0xff]
        %v1262 = vld [vmem:[#allocation3 + $0x38] sm:$0xff]
        %v1263 = vld [vmem:[#allocation3 + $0x40] sm:$0xff]
        %v1264 = vld [vmem:[#allocation3 + $0x48] sm:$0xff]
        %v1265 = vld [vmem:[#allocation3 + $0x50] sm:$0xff]
        %v1266 = vld [vmem:[#allocation3 + $0x58] sm:$0xff]
        %v1267 = vld [vmem:[#allocation3 + $0x60] sm:$0xff]
        %v1268 = vld [vmem:[#allocation3 + $0x68] sm:$0xff]
        %v1269 = vld [vmem:[#allocation3 + $0x70] sm:$0xff]
        %v1270 = vld [vmem:[#allocation3 + $0x78] sm:$0xff]
        %v1271 = vadd.f32 %v1255, %v1216
        %v1272 = vadd.f32 %v1256, %v1218
        %v1273 = vadd.f32 %v1257, %v1221
        %v1274 = vadd.f32 %v1258, %v1223
        %v1275 = vadd.f32 %v1259, %v1226
        %v1276 = vadd.f32 %v1260, %v1228
        %v1277 = vadd.f32 %v1261, %v1231
        %v1278 = vadd.f32 %v1262, %v1233
        %v1279 = vadd.f32 %v1263, %v1236
        %v1280 = vadd.f32 %v1264, %v1238
        %v1281 = vadd.f32 %v1265, %v1241
        %v1282 = vadd.f32 %v1266, %v1243
        %v1283 = vadd.f32 %v1267, %v1246
        %v1284 = vadd.f32 %v1268, %v1248
        %v1285 = vadd.f32 %v1269, %v1251
        %v1286 = vadd.f32 %v1270, %v1253
        %1287 = vst [vmem:[#allocation3] sm:$0xff] %v1271
        %1288 = vst [vmem:[#allocation3 + $0x8] sm:$0xff] %v1272
        %1289 = vst [vmem:[#allocation3 + $0x10] sm:$0xff] %v1273
        %1290 = vst [vmem:[#allocation3 + $0x18] sm:$0xff] %v1274
        %1291 = vst [vmem:[#allocation3 + $0x20] sm:$0xff] %v1275
        %1292 = vst [vmem:[#allocation3 + $0x28] sm:$0xff] %v1276
        %1293 = vst [vmem:[#allocation3 + $0x30] sm:$0xff] %v1277
        %1294 = vst [vmem:[#allocation3 + $0x38] sm:$0xff] %v1278
        %1295 = vst [vmem:[#allocation3 + $0x40] sm:$0xff] %v1279
        %1296 = vst [vmem:[#allocation3 + $0x48] sm:$0xff] %v1280
        %1297 = vst [vmem:[#allocation3 + $0x50] sm:$0xff] %v1281
        %1298 = vst [vmem:[#allocation3 + $0x58] sm:$0xff] %v1282
        %1299 = vst [vmem:[#allocation3 + $0x60] sm:$0xff] %v1283
        %1300 = vst [vmem:[#allocation3 + $0x68] sm:$0xff] %v1284
        %1301 = vst [vmem:[#allocation3 + $0x70] sm:$0xff] %v1285
        %1302 = vst [vmem:[#allocation3 + $0x78] sm:$0xff] %v1286
        %v1303 = vld [vmem:[#allocation2 + $0x27] sm:$0xff]
        %v1304 = vld [vmem:[#allocation2 + $0x2f] sm:$0xff]
        %v1305 = vld [vmem:[#allocation2 + $0x37] sm:$0xff]
        %v1306 = vld [vmem:[#allocation2 + $0x3f] sm:$0xff]
        %v1307 = vld [vmem:[#allocation2 + $0x47] sm:$0xff]
        %v1308 = vld [vmem:[#allocation2 + $0x4f] sm:$0xff]
        %v1309 = vld [vmem:[#allocation2 + $0x57] sm:$0xff]
        %v1310 = vld [vmem:[#allocation2 + $0x5f] sm:$0xff]
        %v1311 = vld [vmem:[#allocation2 + $0x67] sm:$0xff]
        %v1312 = vld [vmem:[#allocation2 + $0x6f] sm:$0xff]
        %v1313 = vld [vmem:[#allocation2 + $0x77] sm:$0xff]
        %v1314 = vld [vmem:[#allocation2 + $0x7f] sm:$0xff]
        %v1315 = vld [vmem:[#allocation2 + $0x87] sm:$0xff]
        %v1316 = vld [vmem:[#allocation2 + $0x8f] sm:$0xff]
        %v1317 = vld [vmem:[#allocation2 + $0x97] sm:$0xff]
        %v1318 = vld [vmem:[#allocation2 + $0x9f] sm:$0xff]
        %v1319 = vld [vmem:[#allocation2 + $0x28] sm:$0xff]
        %v1320 = vld [vmem:[#allocation2 + $0x30] sm:$0xff]
        %v1321 = vld [vmem:[#allocation2 + $0x38] sm:$0xff]
        %v1322 = vld [vmem:[#allocation2 + $0x40] sm:$0xff]
        %v1323 = vld [vmem:[#allocation2 + $0x48] sm:$0xff]
        %v1324 = vld [vmem:[#allocation2 + $0x50] sm:$0xff]
        %v1325 = vld [vmem:[#allocation2 + $0x58] sm:$0xff]
        %v1326 = vld [vmem:[#allocation2 + $0x60] sm:$0xff]
        %v1327 = vld [vmem:[#allocation2 + $0x68] sm:$0xff]
        %v1328 = vld [vmem:[#allocation2 + $0x70] sm:$0xff]
        %v1329 = vld [vmem:[#allocation2 + $0x78] sm:$0xff]
        %v1330 = vld [vmem:[#allocation2 + $0x80] sm:$0xff]
        %v1331 = vld [vmem:[#allocation2 + $0x88] sm:$0xff]
        %v1332 = vld [vmem:[#allocation2 + $0x90] sm:$0xff]
        %v1333 = vld [vmem:[#allocation2 + $0x98] sm:$0xff]
        %v1334 = vld [vmem:[#allocation2 + $0xa0] sm:$0xff]
        %v1335 = vld [vmem:[#allocation2 + $0x29] sm:$0xff]
        %v1336 = vld [vmem:[#allocation2 + $0x31] sm:$0xff]
        %v1337 = vld [vmem:[#allocation2 + $0x39] sm:$0xff]
        %v1338 = vld [vmem:[#allocation2 + $0x41] sm:$0xff]
        %v1339 = vld [vmem:[#allocation2 + $0x49] sm:$0xff]
        %v1340 = vld [vmem:[#allocation2 + $0x51] sm:$0xff]
        %v1341 = vld [vmem:[#allocation2 + $0x59] sm:$0xff]
        %v1342 = vld [vmem:[#allocation2 + $0x61] sm:$0xff]
        %v1343 = vld [vmem:[#allocation2 + $0x69] sm:$0xff]
        %v1344 = vld [vmem:[#allocation2 + $0x71] sm:$0xff]
        %v1345 = vld [vmem:[#allocation2 + $0x79] sm:$0xff]
        %v1346 = vld [vmem:[#allocation2 + $0x81] sm:$0xff]
        %v1347 = vld [vmem:[#allocation2 + $0x89] sm:$0xff]
        %v1348 = vld [vmem:[#allocation2 + $0x91] sm:$0xff]
        %v1349 = vld [vmem:[#allocation2 + $0x99] sm:$0xff]
        %v1350 = vld [vmem:[#allocation2 + $0xa1] sm:$0xff]
        %v1351 = vpack.c.bf16 %v1304, %v1303
        %v1352 = vpack.c.bf16 %v1320, %v1319
        %v1353 = vpack.c.bf16 %v1336, %v1335
        %v1354 = vpack.c.bf16 %v1306, %v1305
        %v1355 = vpack.c.bf16 %v1322, %v1321
        %v1356 = vpack.c.bf16 %v1338, %v1337
        %v1357 = vpack.c.bf16 %v1308, %v1307
        %v1358 = vpack.c.bf16 %v1324, %v1323
        %v1359 = vpack.c.bf16 %v1340, %v1339
        %v1360 = vpack.c.bf16 %v1310, %v1309
        %v1361 = vpack.c.bf16 %v1326, %v1325
        %v1362 = vpack.c.bf16 %v1342, %v1341
        %v1363 = vpack.c.bf16 %v1312, %v1311
        %v1364 = vpack.c.bf16 %v1328, %v1327
        %v1365 = vpack.c.bf16 %v1344, %v1343
        %v1366 = vpack.c.bf16 %v1314, %v1313
        %v1367 = vpack.c.bf16 %v1330, %v1329
        %v1368 = vpack.c.bf16 %v1346, %v1345
        %v1369 = vpack.c.bf16 %v1316, %v1315
        %v1370 = vpack.c.bf16 %v1332, %v1331
        %v1371 = vpack.c.bf16 %v1348, %v1347
        %v1372 = vpack.c.bf16 %v1318, %v1317
        %v1373 = vpack.c.bf16 %v1334, %v1333
        %v1374 = vpack.c.bf16 %v1350, %v1349
        %s1375 = scalar_lea.vmem %s2, 384
        %v1376 = vld [vmem:[%s1375] sm:$0xf]
        %v1377 = vld [vmem:[%s1375 + $0x4] sm:$0xf]
        %v1378 = vld [vmem:[%s1375 + $0x8] sm:$0xf]
        %v1379 = vld [vmem:[%s1375 + $0xc] sm:$0xf]
        %v1380 = vld [vmem:[%s1375 + $0x10] sm:$0xf]
        %v1381 = vld [vmem:[%s1375 + $0x14] sm:$0xf]
        %v1382 = vld [vmem:[%s1375 + $0x18] sm:$0xf]
        %v1383 = vld [vmem:[%s1375 + $0x1c] sm:$0xf]
        %v1384 = vld [vmem:[%s1375 + $0x20] sm:$0xf]
        %v1385 = vld [vmem:[%s1375 + $0x24] sm:$0xf]
        %v1386 = vld [vmem:[%s1375 + $0x28] sm:$0xf]
        %v1387 = vld [vmem:[%s1375 + $0x2c] sm:$0xf]
        %v1388 = vld [vmem:[%s1375 + $0x30] sm:$0xf]
        %v1389 = vld [vmem:[%s1375 + $0x34] sm:$0xf]
        %v1390 = vld [vmem:[%s1375 + $0x38] sm:$0xf]
        %v1391 = vld [vmem:[%s1375 + $0x3c] sm:$0xf]
        %v1392 = vld [vmem:[%s1375 + $0x40] sm:$0xf]
        %v1393 = vld [vmem:[%s1375 + $0x44] sm:$0xf]
        %v1394 = vld [vmem:[%s1375 + $0x48] sm:$0xf]
        %v1395 = vld [vmem:[%s1375 + $0x4c] sm:$0xf]
        %v1396 = vld [vmem:[%s1375 + $0x50] sm:$0xf]
        %v1397 = vld [vmem:[%s1375 + $0x54] sm:$0xf]
        %v1398 = vld [vmem:[%s1375 + $0x58] sm:$0xf]
        %v1399 = vld [vmem:[%s1375 + $0x5c] sm:$0xf]
        %v1400 = vld [vmem:[%s1375 + $0x60] sm:$0xf]
        %v1401 = vld [vmem:[%s1375 + $0x64] sm:$0xf]
        %v1402 = vld [vmem:[%s1375 + $0x68] sm:$0xf]
        %v1403 = vld [vmem:[%s1375 + $0x6c] sm:$0xf]
        %v1404 = vld [vmem:[%s1375 + $0x70] sm:$0xf]
        %v1405 = vld [vmem:[%s1375 + $0x74] sm:$0xf]
        %v1406 = vld [vmem:[%s1375 + $0x78] sm:$0xf]
        %v1407 = vld [vmem:[%s1375 + $0x7c] sm:$0xf]
        %v1408 = vld [vmem:[%s1375 + $0x80] sm:$0xf]
        %v1409 = vld [vmem:[%s1375 + $0x84] sm:$0xf]
        %v1410 = vld [vmem:[%s1375 + $0x88] sm:$0xf]
        %v1411 = vld [vmem:[%s1375 + $0x8c] sm:$0xf]
        %v1412 = vld [vmem:[%s1375 + $0x90] sm:$0xf]
        %v1413 = vld [vmem:[%s1375 + $0x94] sm:$0xf]
        %v1414 = vld [vmem:[%s1375 + $0x98] sm:$0xf]
        %v1415 = vld [vmem:[%s1375 + $0x9c] sm:$0xf]
        %v1416 = vld [vmem:[%s1375 + $0xa0] sm:$0xf]
        %v1417 = vld [vmem:[%s1375 + $0xa4] sm:$0xf]
        %v1418 = vld [vmem:[%s1375 + $0xa8] sm:$0xf]
        %v1419 = vld [vmem:[%s1375 + $0xac] sm:$0xf]
        %v1420 = vld [vmem:[%s1375 + $0xb0] sm:$0xf]
        %v1421 = vld [vmem:[%s1375 + $0xb4] sm:$0xf]
        %v1422 = vld [vmem:[%s1375 + $0xb8] sm:$0xf]
        %v1423 = vld [vmem:[%s1375 + $0xbc] sm:$0xf]
        %v1472 = vunpack.c.l.b16 %v1376
        %v1473 = vunpack.c.l.b16 %v1377
        %v1474 = vunpack.c.l.b16 %v1378
        %v1475 = vunpack.c.l.b16 %v1379
        %v1476 = vunpack.c.l.b16 %v1380
        %v1477 = vunpack.c.l.b16 %v1381
        %v1478 = vunpack.c.l.b16 %v1382
        %v1479 = vunpack.c.l.b16 %v1383
        %v1480 = vunpack.c.l.b16 %v1384
        %v1481 = vunpack.c.l.b16 %v1385
        %v1482 = vunpack.c.l.b16 %v1386
        %v1483 = vunpack.c.l.b16 %v1387
        %v1484 = vunpack.c.l.b16 %v1388
        %v1485 = vunpack.c.l.b16 %v1389
        %v1486 = vunpack.c.l.b16 %v1390
        %v1487 = vunpack.c.l.b16 %v1391
        %v1488 = vunpack.c.l.b16 %v1392
        %v1489 = vunpack.c.l.b16 %v1393
        %v1490 = vunpack.c.l.b16 %v1394
        %v1491 = vunpack.c.l.b16 %v1395
        %v1492 = vunpack.c.l.b16 %v1396
        %v1493 = vunpack.c.l.b16 %v1397
        %v1494 = vunpack.c.l.b16 %v1398
        %v1495 = vunpack.c.l.b16 %v1399
        %v1496 = vunpack.c.l.b16 %v1400
        %v1497 = vunpack.c.l.b16 %v1401
        %v1498 = vunpack.c.l.b16 %v1402
        %v1499 = vunpack.c.l.b16 %v1403
        %v1500 = vunpack.c.l.b16 %v1404
        %v1501 = vunpack.c.l.b16 %v1405
        %v1502 = vunpack.c.l.b16 %v1406
        %v1503 = vunpack.c.l.b16 %v1407
        %v1504 = vunpack.c.l.b16 %v1408
        %v1505 = vunpack.c.l.b16 %v1409
        %v1506 = vunpack.c.l.b16 %v1410
        %v1507 = vunpack.c.l.b16 %v1411
        %v1508 = vunpack.c.l.b16 %v1412
        %v1509 = vunpack.c.l.b16 %v1413
        %v1510 = vunpack.c.l.b16 %v1414
        %v1511 = vunpack.c.l.b16 %v1415
        %v1512 = vunpack.c.l.b16 %v1416
        %v1513 = vunpack.c.l.b16 %v1417
        %v1514 = vunpack.c.l.b16 %v1418
        %v1515 = vunpack.c.l.b16 %v1419
        %v1516 = vunpack.c.l.b16 %v1420
        %v1517 = vunpack.c.l.b16 %v1421
        %v1518 = vunpack.c.l.b16 %v1422
        %v1519 = vunpack.c.l.b16 %v1423
        %v1520 = vpack.c.b16 %v1473, %v1472
        %v1521 = vpack.c.b16 %v1475, %v1474
        %v1522 = vpack.c.b16 %v1477, %v1476
        %v1523 = vpack.c.b16 %v1479, %v1478
        %v1524 = vpack.c.b16 %v1481, %v1480
        %v1525 = vpack.c.b16 %v1483, %v1482
        %v1526 = vpack.c.b16 %v1485, %v1484
        %v1527 = vpack.c.b16 %v1487, %v1486
        %v1528 = vpack.c.b16 %v1489, %v1488
        %v1529 = vpack.c.b16 %v1491, %v1490
        %v1530 = vpack.c.b16 %v1493, %v1492
        %v1531 = vpack.c.b16 %v1495, %v1494
        %v1532 = vpack.c.b16 %v1497, %v1496
        %v1533 = vpack.c.b16 %v1499, %v1498
        %v1534 = vpack.c.b16 %v1501, %v1500
        %v1535 = vpack.c.b16 %v1503, %v1502
        %v1536 = vpack.c.b16 %v1505, %v1504
        %v1537 = vpack.c.b16 %v1507, %v1506
        %v1538 = vpack.c.b16 %v1509, %v1508
        %v1539 = vpack.c.b16 %v1511, %v1510
        %v1540 = vpack.c.b16 %v1513, %v1512
        %v1541 = vpack.c.b16 %v1515, %v1514
        %v1542 = vpack.c.b16 %v1517, %v1516
        %v1543 = vpack.c.b16 %v1519, %v1518
        %1568 = vmatpush.bf16.msra.mxu0 %v1527
        %1569 = vmatpush.bf16.msra.mxu0 %v1526
        %1570 = vmatpush.bf16.msra.mxu0 %v1525
        %1571 = vmatpush.bf16.msra.mxu0 %v1524
        %1572 = vmatpush.bf16.msra.mxu0 %v1523
        %1573 = vmatpush.bf16.msra.mxu0 %v1522
        %1574 = vmatpush.bf16.msra.mxu0 %v1521
        %1575 = vmatpush.bf16.msra.mxu0 %v1520
        %1576 = vmatmul.bf16.gmra.mxu0 %v1351
        %v1577 = vpop.f32.mrf.mxu0
        %v1578 = vadd.f32 0.0, %v1577
        %v1579 = vpop.f32.mrf.mxu0
        %v1580 = vadd.f32 0.0, %v1579
        %1581 = vmatmul.bf16.gmra.mxu0 %v1354
        %v1582 = vpop.f32.mrf.mxu0
        %v1583 = vadd.f32 0.0, %v1582
        %v1584 = vpop.f32.mrf.mxu0
        %v1585 = vadd.f32 0.0, %v1584
        %1586 = vmatmul.bf16.gmra.mxu0 %v1357
        %v1587 = vpop.f32.mrf.mxu0
        %v1588 = vadd.f32 0.0, %v1587
        %v1589 = vpop.f32.mrf.mxu0
        %v1590 = vadd.f32 0.0, %v1589
        %1591 = vmatmul.bf16.gmra.mxu0 %v1360
        %v1592 = vpop.f32.mrf.mxu0
        %v1593 = vadd.f32 0.0, %v1592
        %v1594 = vpop.f32.mrf.mxu0
        %v1595 = vadd.f32 0.0, %v1594
        %1596 = vmatmul.bf16.gmra.mxu0 %v1363
        %v1597 = vpop.f32.mrf.mxu0
        %v1598 = vadd.f32 0.0, %v1597
        %v1599 = vpop.f32.mrf.mxu0
        %v1600 = vadd.f32 0.0, %v1599
        %1601 = vmatmul.bf16.gmra.mxu0 %v1366
        %v1602 = vpop.f32.mrf.mxu0
        %v1603 = vadd.f32 0.0, %v1602
        %v1604 = vpop.f32.mrf.mxu0
        %v1605 = vadd.f32 0.0, %v1604
        %1606 = vmatmul.bf16.gmra.mxu0 %v1369
        %v1607 = vpop.f32.mrf.mxu0
        %v1608 = vadd.f32 0.0, %v1607
        %v1609 = vpop.f32.mrf.mxu0
        %v1610 = vadd.f32 0.0, %v1609
        %1611 = vmatmul.bf16.gmra.mxu0 %v1372
        %v1612 = vpop.f32.mrf.mxu0
        %v1613 = vadd.f32 0.0, %v1612
        %v1614 = vpop.f32.mrf.mxu0
        %v1615 = vadd.f32 0.0, %v1614
        %1616 = vdwg.mxu0
        %1617 = vmatpush.bf16.msra.mxu0 %v1535
        %1618 = vmatpush.bf16.msra.mxu0 %v1534
        %1619 = vmatpush.bf16.msra.mxu0 %v1533
        %1620 = vmatpush.bf16.msra.mxu0 %v1532
        %1621 = vmatpush.bf16.msra.mxu0 %v1531
        %1622 = vmatpush.bf16.msra.mxu0 %v1530
        %1623 = vmatpush.bf16.msra.mxu0 %v1529
        %1624 = vmatpush.bf16.msra.mxu0 %v1528
        %1625 = vmatmul.bf16.gmra.mxu0 %v1352
        %v1626 = vpop.f32.mrf.mxu0
        %v1627 = vadd.f32 %v1578, %v1626
        %v1628 = vpop.f32.mrf.mxu0
        %v1629 = vadd.f32 %v1580, %v1628
        %1630 = vmatmul.bf16.gmra.mxu0 %v1355
        %v1631 = vpop.f32.mrf.mxu0
        %v1632 = vadd.f32 %v1583, %v1631
        %v1633 = vpop.f32.mrf.mxu0
        %v1634 = vadd.f32 %v1585, %v1633
        %1635 = vmatmul.bf16.gmra.mxu0 %v1358
        %v1636 = vpop.f32.mrf.mxu0
        %v1637 = vadd.f32 %v1588, %v1636
        %v1638 = vpop.f32.mrf.mxu0
        %v1639 = vadd.f32 %v1590, %v1638
        %1640 = vmatmul.bf16.gmra.mxu0 %v1361
        %v1641 = vpop.f32.mrf.mxu0
        %v1642 = vadd.f32 %v1593, %v1641
        %v1643 = vpop.f32.mrf.mxu0
        %v1644 = vadd.f32 %v1595, %v1643
        %1645 = vmatmul.bf16.gmra.mxu0 %v1364
        %v1646 = vpop.f32.mrf.mxu0
        %v1647 = vadd.f32 %v1598, %v1646
        %v1648 = vpop.f32.mrf.mxu0
        %v1649 = vadd.f32 %v1600, %v1648
        %1650 = vmatmul.bf16.gmra.mxu0 %v1367
        %v1651 = vpop.f32.mrf.mxu0
        %v1652 = vadd.f32 %v1603, %v1651
        %v1653 = vpop.f32.mrf.mxu0
        %v1654 = vadd.f32 %v1605, %v1653
        %1655 = vmatmul.bf16.gmra.mxu0 %v1370
        %v1656 = vpop.f32.mrf.mxu0
        %v1657 = vadd.f32 %v1608, %v1656
        %v1658 = vpop.f32.mrf.mxu0
        %v1659 = vadd.f32 %v1610, %v1658
        %1660 = vmatmul.bf16.gmra.mxu0 %v1373
        %v1661 = vpop.f32.mrf.mxu0
        %v1662 = vadd.f32 %v1613, %v1661
        %v1663 = vpop.f32.mrf.mxu0
        %v1664 = vadd.f32 %v1615, %v1663
        %1665 = vdwg.mxu0
        %1666 = vmatpush.bf16.msra.mxu0 %v1543
        %1667 = vmatpush.bf16.msra.mxu0 %v1542
        %1668 = vmatpush.bf16.msra.mxu0 %v1541
        %1669 = vmatpush.bf16.msra.mxu0 %v1540
        %1670 = vmatpush.bf16.msra.mxu0 %v1539
        %1671 = vmatpush.bf16.msra.mxu0 %v1538
        %1672 = vmatpush.bf16.msra.mxu0 %v1537
        %1673 = vmatpush.bf16.msra.mxu0 %v1536
        %1674 = vmatmul.bf16.gmra.mxu0 %v1353
        %v1675 = vpop.f32.mrf.mxu0
        %v1676 = vadd.f32 %v1627, %v1675
        %v1677 = vpop.f32.mrf.mxu0
        %v1678 = vadd.f32 %v1629, %v1677
        %1679 = vmatmul.bf16.gmra.mxu0 %v1356
        %v1680 = vpop.f32.mrf.mxu0
        %v1681 = vadd.f32 %v1632, %v1680
        %v1682 = vpop.f32.mrf.mxu0
        %v1683 = vadd.f32 %v1634, %v1682
        %1684 = vmatmul.bf16.gmra.mxu0 %v1359
        %v1685 = vpop.f32.mrf.mxu0
        %v1686 = vadd.f32 %v1637, %v1685
        %v1687 = vpop.f32.mrf.mxu0
        %v1688 = vadd.f32 %v1639, %v1687
        %1689 = vmatmul.bf16.gmra.mxu0 %v1362
        %v1690 = vpop.f32.mrf.mxu0
        %v1691 = vadd.f32 %v1642, %v1690
        %v1692 = vpop.f32.mrf.mxu0
        %v1693 = vadd.f32 %v1644, %v1692
        %1694 = vmatmul.bf16.gmra.mxu0 %v1365
        %v1695 = vpop.f32.mrf.mxu0
        %v1696 = vadd.f32 %v1647, %v1695
        %v1697 = vpop.f32.mrf.mxu0
        %v1698 = vadd.f32 %v1649, %v1697
        %1699 = vmatmul.bf16.gmra.mxu0 %v1368
        %v1700 = vpop.f32.mrf.mxu0
        %v1701 = vadd.f32 %v1652, %v1700
        %v1702 = vpop.f32.mrf.mxu0
        %v1703 = vadd.f32 %v1654, %v1702
        %1704 = vmatmul.bf16.gmra.mxu0 %v1371
        %v1705 = vpop.f32.mrf.mxu0
        %v1706 = vadd.f32 %v1657, %v1705
        %v1707 = vpop.f32.mrf.mxu0
        %v1708 = vadd.f32 %v1659, %v1707
        %1709 = vmatmul.bf16.gmra.mxu0 %v1374
        %v1710 = vpop.f32.mrf.mxu0
        %v1711 = vadd.f32 %v1662, %v1710
        %v1712 = vpop.f32.mrf.mxu0
        %v1713 = vadd.f32 %v1664, %v1712
        %1714 = vdwg.mxu0
        %v1715 = vld [vmem:[#allocation3] sm:$0xff]
        %v1716 = vld [vmem:[#allocation3 + $0x8] sm:$0xff]
        %v1717 = vld [vmem:[#allocation3 + $0x10] sm:$0xff]
        %v1718 = vld [vmem:[#allocation3 + $0x18] sm:$0xff]
        %v1719 = vld [vmem:[#allocation3 + $0x20] sm:$0xff]
        %v1720 = vld [vmem:[#allocation3 + $0x28] sm:$0xff]
        %v1721 = vld [vmem:[#allocation3 + $0x30] sm:$0xff]
        %v1722 = vld [vmem:[#allocation3 + $0x38] sm:$0xff]
        %v1723 = vld [vmem:[#allocation3 + $0x40] sm:$0xff]
        %v1724 = vld [vmem:[#allocation3 + $0x48] sm:$0xff]
        %v1725 = vld [vmem:[#allocation3 + $0x50] sm:$0xff]
        %v1726 = vld [vmem:[#allocation3 + $0x58] sm:$0xff]
        %v1727 = vld [vmem:[#allocation3 + $0x60] sm:$0xff]
        %v1728 = vld [vmem:[#allocation3 + $0x68] sm:$0xff]
        %v1729 = vld [vmem:[#allocation3 + $0x70] sm:$0xff]
        %v1730 = vld [vmem:[#allocation3 + $0x78] sm:$0xff]
        %v1731 = vadd.f32 %v1715, %v1676
        %v1732 = vadd.f32 %v1716, %v1678
        %v1733 = vadd.f32 %v1717, %v1681
        %v1734 = vadd.f32 %v1718, %v1683
        %v1735 = vadd.f32 %v1719, %v1686
        %v1736 = vadd.f32 %v1720, %v1688
        %v1737 = vadd.f32 %v1721, %v1691
        %v1738 = vadd.f32 %v1722, %v1693
        %v1739 = vadd.f32 %v1723, %v1696
        %v1740 = vadd.f32 %v1724, %v1698
        %v1741 = vadd.f32 %v1725, %v1701
        %v1742 = vadd.f32 %v1726, %v1703
        %v1743 = vadd.f32 %v1727, %v1706
        %v1744 = vadd.f32 %v1728, %v1708
        %v1745 = vadd.f32 %v1729, %v1711
        %v1746 = vadd.f32 %v1730, %v1713
        %1747 = vst [vmem:[#allocation3] sm:$0xff] %v1731
        %1748 = vst [vmem:[#allocation3 + $0x8] sm:$0xff] %v1732
        %1749 = vst [vmem:[#allocation3 + $0x10] sm:$0xff] %v1733
        %1750 = vst [vmem:[#allocation3 + $0x18] sm:$0xff] %v1734
        %1751 = vst [vmem:[#allocation3 + $0x20] sm:$0xff] %v1735
        %1752 = vst [vmem:[#allocation3 + $0x28] sm:$0xff] %v1736
        %1753 = vst [vmem:[#allocation3 + $0x30] sm:$0xff] %v1737
        %1754 = vst [vmem:[#allocation3 + $0x38] sm:$0xff] %v1738
        %1755 = vst [vmem:[#allocation3 + $0x40] sm:$0xff] %v1739
        %1756 = vst [vmem:[#allocation3 + $0x48] sm:$0xff] %v1740
        %1757 = vst [vmem:[#allocation3 + $0x50] sm:$0xff] %v1741
        %1758 = vst [vmem:[#allocation3 + $0x58] sm:$0xff] %v1742
        %1759 = vst [vmem:[#allocation3 + $0x60] sm:$0xff] %v1743
        %1760 = vst [vmem:[#allocation3 + $0x68] sm:$0xff] %v1744
        %1761 = vst [vmem:[#allocation3 + $0x70] sm:$0xff] %v1745
        %1762 = vst [vmem:[#allocation3 + $0x78] sm:$0xff] %v1746
        %v1763 = vld [vmem:[%s5] sm:$0x1]
        %v1764 = vld [vmem:[#allocation3] sm:$0xff]
        %v1766 = vperm.slane %v1763, 0
        %v1768 = vadd.f32 %v1764, %v1766
        %v1769 = vmax.f32 %v1768, 0.0
        %1770 = vst [vmem:[#allocation4] sm:$0xff] %v1769
        %v1771 = vld [vmem:[#allocation3 + $0x10] sm:$0xff]
        %v1772 = vadd.f32 %v1771, %v1766
        %v1773 = vmax.f32 %v1772, 0.0
        %1774 = vst [vmem:[#allocation4 + $0x8] sm:$0xff] %v1773
        %v1775 = vld [vmem:[#allocation3 + $0x20] sm:$0xff]
        %v1776 = vadd.f32 %v1775, %v1766
        %v1777 = vmax.f32 %v1776, 0.0
        %1778 = vst [vmem:[#allocation4 + $0x10] sm:$0xff] %v1777
        %v1779 = vld [vmem:[#allocation3 + $0x30] sm:$0xff]
        %v1780 = vadd.f32 %v1779, %v1766
        %v1781 = vmax.f32 %v1780, 0.0
        %1782 = vst [vmem:[#allocation4 + $0x18] sm:$0xff] %v1781
        %v1783 = vld [vmem:[#allocation3 + $0x40] sm:$0xff]
        %v1784 = vadd.f32 %v1783, %v1766
        %v1785 = vmax.f32 %v1784, 0.0
        %1786 = vst [vmem:[#allocation4 + $0x20] sm:$0xff] %v1785
        %v1787 = vld [vmem:[#allocation3 + $0x50] sm:$0xff]
        %v1788 = vadd.f32 %v1787, %v1766
        %v1789 = vmax.f32 %v1788, 0.0
        %1790 = vst [vmem:[#allocation4 + $0x28] sm:$0xff] %v1789
        %v1791 = vld [vmem:[#allocation3 + $0x60] sm:$0xff]
        %v1792 = vadd.f32 %v1791, %v1766
        %v1793 = vmax.f32 %v1792, 0.0
        %1794 = vst [vmem:[#allocation4 + $0x30] sm:$0xff] %v1793
        %v1795 = vld [vmem:[#allocation3 + $0x70] sm:$0xff]
        %v1796 = vadd.f32 %v1795, %v1766
        %v1797 = vmax.f32 %v1796, 0.0
        %1798 = vst [vmem:[#allocation4 + $0x38] sm:$0xff] %v1797
        %v1799 = vld [vmem:[#allocation4] sm:$0xff]
        %v1800 = vld [vmem:[#allocation4 + $0x8] sm:$0xff]
        %v1801 = vld [vmem:[#allocation4 + $0x10] sm:$0xff]
        %v1802 = vld [vmem:[#allocation4 + $0x18] sm:$0xff]
        %v1803 = vld [vmem:[#allocation4 + $0x20] sm:$0xff]
        %v1804 = vld [vmem:[#allocation4 + $0x28] sm:$0xff]
        %v1805 = vld [vmem:[#allocation4 + $0x30] sm:$0xff]
        %v1806 = vld [vmem:[#allocation4 + $0x38] sm:$0xff]
        %v1807 = vpack.c.bf16 %v1800, %v1799
        %v1808 = vpack.c.bf16 %v1802, %v1801
        %v1809 = vpack.c.bf16 %v1804, %v1803
        %v1810 = vpack.c.bf16 %v1806, %v1805
        %v1811 = vld [vmem:[%s3] sm:$0xf]
        %v1812 = vld [vmem:[%s3 + $0x4] sm:$0xf]
        %v1813 = vld [vmem:[%s3 + $0x8] sm:$0xf]
        %v1814 = vld [vmem:[%s3 + $0xc] sm:$0xf]
        %v1815 = vld [vmem:[%s3 + $0x10] sm:$0xf]
        %v1816 = vld [vmem:[%s3 + $0x14] sm:$0xf]
        %v1817 = vld [vmem:[%s3 + $0x18] sm:$0xf]
        %v1818 = vld [vmem:[%s3 + $0x1c] sm:$0xf]
        %v1819 = vld [vmem:[%s3 + $0x20] sm:$0xf]
        %v1820 = vld [vmem:[%s3 + $0x24] sm:$0xf]
        %v1821 = vld [vmem:[%s3 + $0x28] sm:$0xf]
        %v1822 = vld [vmem:[%s3 + $0x2c] sm:$0xf]
        %v1823 = vld [vmem:[%s3 + $0x30] sm:$0xf]
        %v1824 = vld [vmem:[%s3 + $0x34] sm:$0xf]
        %v1825 = vld [vmem:[%s3 + $0x38] sm:$0xf]
        %v1826 = vld [vmem:[%s3 + $0x3c] sm:$0xf]
        %v1827 = vld [vmem:[%s6] sm:$0x1]
        %v1829 = vperm.slane %v1827, 0
        %v1847 = vunpack.c.l.b16 %v1811
        %v1848 = vunpack.c.l.b16 %v1812
        %v1849 = vunpack.c.l.b16 %v1813
        %v1850 = vunpack.c.l.b16 %v1814
        %v1851 = vunpack.c.l.b16 %v1815
        %v1852 = vunpack.c.l.b16 %v1816
        %v1853 = vunpack.c.l.b16 %v1817
        %v1854 = vunpack.c.l.b16 %v1818
        %v1855 = vunpack.c.l.b16 %v1819
        %v1856 = vunpack.c.l.b16 %v1820
        %v1857 = vunpack.c.l.b16 %v1821
        %v1858 = vunpack.c.l.b16 %v1822
        %v1859 = vunpack.c.l.b16 %v1823
        %v1860 = vunpack.c.l.b16 %v1824
        %v1861 = vunpack.c.l.b16 %v1825
        %v1862 = vunpack.c.l.b16 %v1826
        %v1863 = vpack.c.b16 %v1848, %v1847
        %v1864 = vpack.c.b16 %v1850, %v1849
        %v1865 = vpack.c.b16 %v1852, %v1851
        %v1866 = vpack.c.b16 %v1854, %v1853
        %v1867 = vpack.c.b16 %v1856, %v1855
        %v1868 = vpack.c.b16 %v1858, %v1857
        %v1869 = vpack.c.b16 %v1860, %v1859
        %v1870 = vpack.c.b16 %v1862, %v1861
        %1879 = vmatpush.bf16.msra.mxu0 %v1870
        %1880 = vmatpush.bf16.msra.mxu0 %v1869
        %1881 = vmatpush.bf16.msra.mxu0 %v1868
        %1882 = vmatpush.bf16.msra.mxu0 %v1867
        %1883 = vmatpush.bf16.msra.mxu0 %v1866
        %1884 = vmatpush.bf16.msra.mxu0 %v1865
        %1885 = vmatpush.bf16.msra.mxu0 %v1864
        %1886 = vmatpush.bf16.msra.mxu0 %v1863
        %1887 = vmatmul.bf16.gmra.mxu0 %v1807
        %v1888 = vpop.f32.mrf.mxu0
        %v1889 = vadd.f32 %v1829, %v1888
        %v1890 = vpop.f32.mrf.mxu0
        %v1891 = vadd.f32 %v1829, %v1890
        %1892 = vmatmul.bf16.gmra.mxu0 %v1808
        %v1893 = vpop.f32.mrf.mxu0
        %v1894 = vadd.f32 %v1829, %v1893
        %v1895 = vpop.f32.mrf.mxu0
        %v1896 = vadd.f32 %v1829, %v1895
        %1897 = vmatmul.bf16.gmra.mxu0 %v1809
        %v1898 = vpop.f32.mrf.mxu0
        %v1899 = vadd.f32 %v1829, %v1898
        %v1900 = vpop.f32.mrf.mxu0
        %v1901 = vadd.f32 %v1829, %v1900
        %1902 = vmatmul.bf16.gmra.mxu0 %v1810
        %v1903 = vpop.f32.mrf.mxu0
        %v1904 = vadd.f32 %v1829, %v1903
        %v1905 = vpop.f32.mrf.mxu0
        %v1906 = vadd.f32 %v1829, %v1905
        %1907 = vdwg.mxu0
        %v1908 = vld [vmem:[%s276] sm:$0xff]
        %v1909 = vld [vmem:[%s276 + $0x8] sm:$0xff]
        %v1910 = vld [vmem:[%s276 + $0x10] sm:$0xff]
        %v1911 = vld [vmem:[%s276 + $0x18] sm:$0xff]
        %v1912 = vld [vmem:[%s276 + $0x20] sm:$0xff]
        %v1913 = vld [vmem:[%s276 + $0x28] sm:$0xff]
        %v1914 = vld [vmem:[%s276 + $0x30] sm:$0xff]
        %v1915 = vld [vmem:[%s276 + $0x38] sm:$0xff]
        %v1916 = vadd.f32 %v1889, %v1908
        %v1917 = vadd.f32 %v1891, %v1909
        %v1918 = vadd.f32 %v1894, %v1910
        %v1919 = vadd.f32 %v1896, %v1911
        %v1920 = vadd.f32 %v1899, %v1912
        %v1921 = vadd.f32 %v1901, %v1913
        %v1922 = vadd.f32 %v1904, %v1914
        %v1923 = vadd.f32 %v1906, %v1915
        %v1924 = vmax.f32 %v1916, 0.0
        %v1925 = vmax.f32 %v1917, 0.0
        %v1926 = vmax.f32 %v1918, 0.0
        %v1927 = vmax.f32 %v1919, 0.0
        %v1928 = vmax.f32 %v1920, 0.0
        %v1929 = vmax.f32 %v1921, 0.0
        %v1930 = vmax.f32 %v1922, 0.0
        %v1931 = vmax.f32 %v1923, 0.0
        %v1932 = vpack.c.bf16 %v1924, %v1924
        %v1933 = vpack.c.bf16 %v1925, %v1925
        %v1934 = vpack.c.bf16 %v1926, %v1926
        %v1935 = vpack.c.bf16 %v1927, %v1927
        %v1936 = vpack.c.bf16 %v1928, %v1928
        %v1937 = vpack.c.bf16 %v1929, %v1929
        %v1938 = vpack.c.bf16 %v1930, %v1930
        %v1939 = vpack.c.bf16 %v1931, %v1931
        %1940 = vst [vmem:[%s271] sm:$0xf] %v1932
        %1941 = vst [vmem:[%s271 + $0x4] sm:$0xf] %v1933
        %1942 = vst [vmem:[%s271 + $0x8] sm:$0xf] %v1934
        %1943 = vst [vmem:[%s271 + $0xc] sm:$0xf] %v1935
        %1944 = vst [vmem:[%s271 + $0x10] sm:$0xf] %v1936
        %1945 = vst [vmem:[%s271 + $0x14] sm:$0xf] %v1937
        %1946 = vst [vmem:[%s271 + $0x18] sm:$0xf] %v1938
        %1947 = vst [vmem:[%s271 + $0x1c] sm:$0xf] %v1939
        %s1948 = sand.u32 %s181, 1
        %s1949 = scalar_lea.sflag [#allocation6], %s1948
        %s1950 = sand.u32 %s181, 1
        %s1951 = smul.addr %s1950, 32
        %s1952 = scalar_lea.vmem [#allocation5], %s1951
        // Predicated region
        $region49: #{bottleneck_forward.1} parent=47 // pred_check
          %p1953 = pneg %p191
        $region50: #{bottleneck_forward.1} parent=47 // pred_check_branch
          %1955 = sbr.rel (%p1953) target = $region52
        $region51: #{bottleneck_forward.1} parent=47 // pred_region
          %1957 = vsyncadd %s1949, 0
          %s1958 = smul.addr %s21, 8
          %s1959 = smul.addr %s1958, 4
          %s1960 = scalar_lea.hbm %s7, %s1959
          %s1961 = sshll.u32 %s1952, 4
          %s1962 = int_to_ptr.vmem [resolvable:$true] %s1961
          %s1963 = sshll.u32 %s1960, 4
          %s1964 = int_to_ptr.hbm [resolvable:$true] %s1963
          %1969 = dma.vmem_to_hbm [thread:$0]  %s1962, 512, %s1964, %s1949, 64, 64, 4
        $region52: #{bottleneck_forward.1} parent=47 // pred_fallthru
          _
      $region48: #{bottleneck_forward.1} parent=5 // pred_fallthru
        _
      %p1970 = scmp.le.s32.totalorder 2, %s16
      // Predicated region
      $region53: #{bottleneck_forward.1} parent=5 // pred_check
        %p1971 = pneg %p1970
      $region54: #{bottleneck_forward.1} parent=5 // pred_check_branch
        %1973 = sbr.rel (%p1971) target = $region56
      $region55: #{bottleneck_forward.1} parent=5 // pred_region
        %s1974 = ssub.s32 %s16, 2
        // Predicated region
        $region57: #{bottleneck_forward.1} parent=55 // pred_check
          %p1975 = pneg %p197
        $region58: #{bottleneck_forward.1} parent=55 // pred_check_branch
          %1977 = sbr.rel (%p1975) target = $region60
        $region59: #{bottleneck_forward.1} parent=55 // pred_region
          %s1978 = sand.u32 %s182, 1
          %s1979 = scalar_lea.sflag [#allocation6], %s1978
          %s1980 = sand.u32 %s182, 1
          %s1981 = smul.addr %s1980, 32
          %s1982 = scalar_lea.vmem [#allocation5], %s1981
          %1984 = dma.done %s1979, 512
        $region60: #{bottleneck_forward.1} parent=55 // pred_fallthru
          _
      $region56: #{bottleneck_forward.1} parent=5 // pred_fallthru
        _
    $region6: #{bottleneck_forward.1} parent=1 // loop_footer
      %s20 = sadd.s32 1, %s16
    $region7: #{bottleneck_forward.1} parent=1 // loop_footer_branch
      %15 = sbr.rel target = $region3
    $region8: #{bottleneck_forward.1} parent=1 // loop_exit
      _
    %1985 = vsyncpa [#allocation6], 1
    %s1986 = scalar_lea.sflag [#allocation6], 1
    %1987 = vsyncpa %s1986, 1

</llo_original>
